<compile_context>
chip_gen: v7x
topology: tpu7x:2x2x1
jax: 0.10.0
libtpu: 0.0.40
codegen_flags: <defaults>
</compile_context>

<pallas_src>
import functools

import jax
import jax.numpy as jnp
from jax import lax
from jax.experimental import pallas as pl
from jax.experimental.pallas import tpu as pltpu


def rs_gcn_kernel(cp, nq, mxu_dtype, reassoc, v_ref, pg_w_ref, pg_b_ref,
                  th_w_ref, th_b_ref, ww_ref, wb_ref,
                  out_ref, sum_ref, sq_ref, *scratch):
    """One (batch b, query-tile q) grid step.

    v_ref     : (1, D, N)   full sequence for this batch element (mxu_dtype)
    pg_w_ref  : (2Cp, D)    fused [g ; phi/N] 1x1-conv weights (mxu_dtype, row-padded)
    pg_b_ref  : (2Cp, 1)    fused biases, f32 (phi rows pre-scaled by 1/N)
    th_w_ref  : (Cp, D)     theta 1x1-conv weight (mxu_dtype, row-padded)
    th_b_ref  : (Cp, 1)     theta bias, f32
    ww_ref    : (D, Cp)     W 1x1-conv weight (mxu_dtype, column-padded)
    wb_ref    : (D, 1)      W 1x1-conv bias, f32
    out_ref   : (1, D, tq)  pre-BatchNorm output tile (mxu_dtype)
    sum_ref   : (1, D, 1)   per-batch per-channel running sum of wy (f32)
    sq_ref    : (1, D, 1)   per-batch per-channel running sum of wy^2 (f32)
    scratch   : reassoc -> [(Cp, Cp) M]        (M = g @ (phi/N)^T, per batch)
                else    -> [(Cp, N) g, (Cp, N) phi/N]
    """
    q = pl.program_id(1)
    tq = out_ref.shape[2]

    @pl.when(q == 0)
    def _():
        sum_ref[...] = jnp.zeros_like(sum_ref)
        sq_ref[...] = jnp.zeros_like(sq_ref)
        if reassoc:
            m_ref, = scratch

            # Accumulate M = g @ (phi/N)^T over N in tq-sized chunks so the
            # live f32 projection temp never exceeds (2Cp, tq) (v7x VMEM).
            def body(i, acc):
                off = pl.multiple_of(i * tq, tq)
                v_c = v_ref[0, :, pl.ds(off, tq)]                     # (D, tq)
                pg = jnp.dot(pg_w_ref[...], v_c,
                             preferred_element_type=jnp.float32) + pg_b_ref[...]
                g_c = pg[0:cp].astype(mxu_dtype)                      # aligned slice
                p_c = pg[cp:2 * cp].astype(mxu_dtype)
                return acc + lax.dot_general(
                    g_c, p_c, dimension_numbers=(((1,), (1,)), ((), ())),
                    preferred_element_type=jnp.float32)

            m = lax.fori_loop(0, nq, body, jnp.zeros((cp, cp), jnp.float32))
            m_ref[...] = m.astype(mxu_dtype)
        else:
            g_ref, phi_ref = scratch
            pg = jnp.dot(pg_w_ref[...], v_ref[0],
                         preferred_element_type=jnp.float32) + pg_b_ref[...]
            g_ref[...] = pg[0:cp].astype(mxu_dtype)
            phi_ref[...] = pg[cp:2 * cp].astype(mxu_dtype)

    # theta projection for this tile only (no (Cp, N) theta scratch needed).
    q0 = pl.multiple_of(q * tq, tq)
    v_t = v_ref[0, :, pl.ds(q0, tq)]                                  # (D, tq)
    th = (jnp.dot(th_w_ref[...], v_t, preferred_element_type=jnp.float32)
          + th_b_ref[...]).astype(mxu_dtype)                          # (Cp, tq)

    if reassoc:
        m_ref, = scratch
        y_t = jnp.dot(m_ref[...], th,
                      preferred_element_type=jnp.float32)             # (Cp, tq)
    else:
        g_ref, phi_ref = scratch
        # r is produced as (N, tq) so both matmuls are MXU-native (no
        # transposed-RHS relayout of the big affinity tile).
        r = lax.dot_general(phi_ref[...], th,
                            dimension_numbers=(((0,), (0,)), ((), ())),
                            preferred_element_type=jnp.float32)       # (N, tq)
        y_t = jnp.dot(g_ref[...], r.astype(mxu_dtype),
                      preferred_element_type=jnp.float32)             # (Cp, tq)

    # W 1x1 conv on the MXU in mxu_dtype (f32 accumulation).
    wy = (jnp.dot(ww_ref[...], y_t.astype(mxu_dtype),
                  preferred_element_type=jnp.float32) + wb_ref[...])  # (D, tq) f32
    out_ref[0] = wy.astype(out_ref.dtype)

    # In-kernel BN statistics: per-channel sum / sum-of-squares, accumulated
    # across the q axis into an output block resident per batch element.
    sum_ref[0] = sum_ref[0] + jnp.sum(wy, axis=1, keepdims=True)
    sq_ref[0] = sq_ref[0] + jnp.sum(wy * wy, axis=1, keepdims=True)


def bn_residual_kernel(wy_ref, v_ref, scale_ref, shift_ref, out_ref):
    # Fused BatchNorm affine + residual add: one HBM pass over wy and v.
    out_ref[0] = wy_ref[0] * scale_ref[...] + shift_ref[...] + v_ref[0]


def _round_up(x, m):
    return (x + m - 1) // m * m


def _vmem_capacity_bytes():
    try:
        info = pltpu.get_tpu_info()
        cap = getattr(info, "vmem_capacity_bytes", None)
        if cap:
            return int(cap)
    except Exception:
        pass
    return 64 * 1024 * 1024          # conservative fallback (v7x-sized)


def _estimate_main_vmem(D, N, cp, tq, mxu_bytes, reassoc):
    est = 2 * D * N * mxu_bytes                       # v block (double-buffered)
    est += 2 * D * tq * mxu_bytes                     # wy output block
    est += 4 * D * 4                                  # stats output blocks
    est += 2 * 4 * cp * D * mxu_bytes                 # pg_w + th_w + ww (x2 buffers)
    est += 2 * (3 * cp + D) * 4                       # biases
    if reassoc:
        est += cp * cp * (mxu_bytes + 4)              # M scratch + f32 accumulator
        est += 2 * cp * tq * (4 + mxu_bytes)          # chunked projection temp (+cast)
    else:
        est += 2 * cp * N * (mxu_bytes + 4)           # g/phi scratch + f32 proj temp
        est += N * tq * (4 + mxu_bytes)               # affinity tile (+cast)
    est += 2 * cp * tq * (4 + mxu_bytes)              # theta / y_t temps (+casts)
    est += 2 * D * tq * 4                             # wy temp + headroom
    return int(est * 1.5)


def _pick_query_tile(N, D, cp, mxu_bytes, reassoc, budget):
    """Largest lane-aligned query tile dividing N whose estimate fits VMEM."""
    if N % 128 != 0:
        return N
    for cand in (2048, 1024, 512, 256, 128):
        if N % cand == 0 and _estimate_main_vmem(D, N, cp, cand, mxu_bytes,
                                                 reassoc) <= budget:
            return cand
    return 128


def _pick_seq_tile(N, D, budget):
    if N % 128 != 0:
        return N
    for cand in (2048, 1024, 512, 256, 128):
        if N % cand == 0 and int(1.5 * 6 * D * cand * 4) <= budget:
            return cand
    return 128


def rs_gcn_pallas(v, params, *, tq=None, mxu_dtype=jnp.bfloat16):
    """v: (B, D, N) float32. Returns v_star: (B, D, N) float32."""
    B, D, N = v.shape
    C = params["g_w"].shape[0]
    mxu_bytes = jnp.dtype(mxu_dtype).itemsize
    pack = 8 * (4 // mxu_bytes)          # sublane packing: 8 f32 rows, 16 bf16 rows
    cp = _round_up(C, pack)              # padded inter_channels -> aligned slices

    # When N > C, reassociate the two affinity GEMMs into a per-batch (Cp, Cp)
    # matrix (exact: no nonlinearity between them).
    reassoc = N > C

    budget = int(0.75 * _vmem_capacity_bytes())
    if tq is None:
        tq = _pick_query_tile(N, D, cp, mxu_bytes, reassoc, budget)
    assert N % tq == 0, "sequence length must be divisible by the query tile"
    assert tq == N or tq % 128 == 0, "query tile must be lane-aligned or full N"
    nq = N // tq

    inv_n = 1.0 / float(N)              # GLOBAL sequence length (tiling-independent)

    def pad_rows(w, b, scale=1.0):
        wp = jnp.zeros((cp, D), jnp.float32).at[:C, :].set(w * scale)
        bp = jnp.zeros((cp, 1), jnp.float32).at[:C, 0].set(b * scale)
        return wp, bp

    g_w, g_b = pad_rows(params["g_w"], params["g_b"])
    p_w, p_b = pad_rows(params["phi_w"], params["phi_b"], scale=inv_n)  # 1/N folded
    t_w, t_b = pad_rows(params["theta_w"], params["theta_b"])
    pg_w = jnp.concatenate([g_w, p_w], axis=0).astype(mxu_dtype)        # (2Cp, D)
    pg_b = jnp.concatenate([g_b, p_b], axis=0)                          # (2Cp, 1)
    th_w = t_w.astype(mxu_dtype)
    th_b = t_b
    ww = (jnp.zeros((D, cp), jnp.float32).at[:, :C].set(params["W_w"])
          .astype(mxu_dtype))                                           # (D, Cp)
    wb = params["W_b"].reshape(D, 1).astype(jnp.float32)

    v_mxu = v.astype(mxu_dtype)   # halve HBM read of v; residual uses f32 v below

    if reassoc:
        scratch = [pltpu.VMEM((cp, cp), mxu_dtype)]                     # M
    else:
        scratch = [pltpu.VMEM((cp, N), mxu_dtype)] * 2                  # g, phi/N

    vmem_limit = min(budget,
                     max(_estimate_main_vmem(D, N, cp, tq, mxu_bytes, reassoc),
                         16 * 1024 * 1024))

    kernel = functools.partial(rs_gcn_kernel, cp, nq, mxu_dtype, reassoc)
    # TODO(synk): the constant-index weight inputs could use
    # pipeline_mode=pl.Buffered(1) to drop their second VMEM buffer; skipped
    # for API-version robustness.
    # TODO(synk): for B == 1 on v7x, split the query-tile range across the two
    # TensorCores via pl.core_map; batch-only "parallel" leaves one core idle.
    wy, s1, s2 = pl.pallas_call(
        kernel,
        out_shape=(jax.ShapeDtypeStruct((B, D, N), mxu_dtype),
                   jax.ShapeDtypeStruct((B, D, 1), jnp.float32),
                   jax.ShapeDtypeStruct((B, D, 1), jnp.float32)),
        grid=(B, nq),
        in_specs=[
            pl.BlockSpec((1, D, N), lambda b, q: (b, 0, 0)),            # v (full seq)
            pl.BlockSpec((2 * cp, D), lambda b, q: (0, 0)),             # fused g/phi W
            pl.BlockSpec((2 * cp, 1), lambda b, q: (0, 0)),             # fused g/phi b
            pl.BlockSpec((cp, D), lambda b, q: (0, 0)),                 # theta W
            pl.BlockSpec((cp, 1), lambda b, q: (0, 0)),                 # theta b
            pl.BlockSpec((D, cp), lambda b, q: (0, 0)),                 # W conv weight
            pl.BlockSpec((D, 1), lambda b, q: (0, 0)),                  # W conv bias
        ],
        out_specs=(
            pl.BlockSpec((1, D, tq), lambda b, q: (b, 0, q)),           # wy tile
            pl.BlockSpec((1, D, 1), lambda b, q: (b, 0, 0)),            # sum (per b)
            pl.BlockSpec((1, D, 1), lambda b, q: (b, 0, 0)),            # sumsq (per b)
        ),
        scratch_shapes=scratch,
        compiler_params=pltpu.CompilerParams(
            dimension_semantics=("parallel", "arbitrary"),
            vmem_limit_bytes=vmem_limit),
    )(v_mxu, pg_w, pg_b, th_w, th_b, ww, wb)

    # BatchNorm1d batch statistics (training mode, biased variance) from the
    # in-kernel per-batch sums: only a tiny (B, D) reduction remains here.
    # TODO(synk): this cross-batch reduction spans the parallel batch grid
    # axis, so it stays in plain JAX.
    count = float(B * N)
    mean = jnp.sum(s1[:, :, 0], axis=0) / count                         # (D,)
    var = jnp.maximum(jnp.sum(s2[:, :, 0], axis=0) / count - mean * mean, 0.0)
    inv_std = lax.rsqrt(var + 1e-5)
    scale = (params["bn_gamma"] * inv_std).reshape(D, 1).astype(jnp.float32)
    shift = (params["bn_beta"] - mean * params["bn_gamma"] * inv_std
             ).reshape(D, 1).astype(jnp.float32)

    # Fused normalize + residual epilogue: one HBM pass over wy and v.
    te = _pick_seq_tile(N, D, budget)
    ep_vmem = min(budget, max(int(1.5 * 6 * D * te * 4), 8 * 1024 * 1024))
    v_star = pl.pallas_call(
        bn_residual_kernel,
        out_shape=jax.ShapeDtypeStruct((B, D, N), jnp.float32),
        grid=(B, N // te),
        in_specs=[
            pl.BlockSpec((1, D, te), lambda b, t: (b, 0, t)),           # wy
            pl.BlockSpec((1, D, te), lambda b, t: (b, 0, t)),           # v (f32)
            pl.BlockSpec((D, 1), lambda b, t: (0, 0)),                  # scale
            pl.BlockSpec((D, 1), lambda b, t: (0, 0)),                  # shift
        ],
        out_specs=pl.BlockSpec((1, D, te), lambda b, t: (b, 0, t)),
        compiler_params=pltpu.CompilerParams(
            dimension_semantics=("parallel", "parallel"),
            vmem_limit_bytes=ep_vmem),
    )(wy, v, scale, shift)
    return v_star


def init_params(key, in_channels, inter_channels):
    """Deterministic synthetic init mirroring the module's parameter shapes."""
    D, C = in_channels, inter_channels
    ks = jax.random.split(key, 8)
    u = lambda k, shape, bound: jax.random.uniform(
        k, shape, jnp.float32, minval=-bound, maxval=bound)
    bd = 1.0 / (D ** 0.5)
    bc = 1.0 / (C ** 0.5)
    return {
        "g_w": u(ks[0], (C, D), bd), "g_b": u(ks[1], (C,), bd),
        "theta_w": u(ks[2], (C, D), bd), "theta_b": u(ks[3], (C,), bd),
        "phi_w": u(ks[4], (C, D), bd), "phi_b": u(ks[5], (C,), bd),
        "W_w": u(ks[6], (D, C), bc), "W_b": u(ks[7], (D,), bc),
        # nn.init.constant(W[1].weight, 0); nn.init.constant(W[1].bias, 0)
        "bn_gamma": jnp.zeros((D,), jnp.float32),
        "bn_beta": jnp.zeros((D,), jnp.float32),
    }


def rs_gcn_reference(v, params):
    """Pure-JAX f32 reference of the PyTorch forward."""
    B, D, N = v.shape
    hi = lax.Precision.HIGHEST
    g_v = jnp.einsum("cd,bdn->bnc", params["g_w"], v, precision=hi) + params["g_b"]
    theta_v = jnp.einsum("cd,bdn->bnc", params["theta_w"], v,
                         precision=hi) + params["theta_b"]
    phi_v = jnp.einsum("cd,bdn->bcn", params["phi_w"], v,
                       precision=hi) + params["phi_b"][:, None]
    R = jnp.einsum("bnc,bcm->bnm", theta_v, phi_v, precision=hi) / N
    y = jnp.einsum("bnm,bmc->bnc", R, g_v, precision=hi)
    wy = jnp.einsum("dc,bnc->bdn", params["W_w"], y,
                    precision=hi) + params["W_b"][:, None]
    mean = jnp.mean(wy, axis=(0, 2), keepdims=True)
    var = jnp.var(wy, axis=(0, 2), keepdims=True)
    w_y = (params["bn_gamma"].reshape(1, D, 1) * (wy - mean)
           * lax.rsqrt(var + 1e-5) + params["bn_beta"].reshape(1, D, 1))
    return w_y + v


if __name__ == "__main__":
    B, D, N, C = 2, 16, 256, 8    # batch, in_channels, sequence length, inter_channels
    TQ = 128                      # query tile -> grid = (B, N // TQ) = (2, 2)

    key = jax.random.PRNGKey(0)
    kx, kp = jax.random.split(key)
    v = jax.random.normal(kx, (B, D, N), jnp.float32)
    params = init_params(kp, D, C)

    run_bf16 = jax.jit(functools.partial(rs_gcn_pallas, tq=TQ))
    run_f32 = jax.jit(functools.partial(rs_gcn_pallas, tq=TQ, mxu_dtype=jnp.float32))
    run_f32_auto = jax.jit(functools.partial(rs_gcn_pallas, mxu_dtype=jnp.float32))

    # 1) Module-faithful init (BN gamma=beta=0 => W_y == 0 => v_star == v), bf16 MXU.
    out = jax.block_until_ready(run_bf16(v, params))
    ref = rs_gcn_reference(v, params)
    assert out.shape == (B, D, N)
    assert jnp.allclose(out, ref, atol=1e-5, rtol=1e-5)

    # 2) Tight structural check of the reassociated (N > C) path: nonzero BN
    #    params, f32 MXU mode, multi-tile grid.
    params2 = dict(params)
    params2["bn_gamma"] = jnp.full((D,), 0.7, jnp.float32)
    params2["bn_beta"] = jnp.full((D,), -0.3, jnp.float32)
    out2 = jax.block_until_ready(run_f32(v, params2))
    ref2 = rs_gcn_reference(v, params2)
    assert jnp.allclose(out2, ref2, atol=1e-3, rtol=1e-3)

    # 3) Default bf16 MXU path with nonzero BN params: loose sanity bound
    #    (bf16 inputs, f32 accumulation).
    out3 = jax.block_until_ready(run_bf16(v, params2))
    assert jnp.allclose(out3, ref2, atol=2e-1, rtol=2e-1)

    # 4) Explicit-affinity path (N <= C, e.g. the short-sequence regime of the
    #    original module): f32 MXU structural check.
    B4, D4, N4, C4 = 2, 16, 64, 96
    kx4, kp4 = jax.random.split(jax.random.PRNGKey(1))
    v4 = jax.random.normal(kx4, (B4, D4, N4), jnp.float32)
    params4 = init_params(kp4, D4, C4)
    params4["bn_gamma"] = jnp.full((D4,), 0.5, jnp.float32)
    params4["bn_beta"] = jnp.full((D4,), 0.1, jnp.float32)
    out4 = jax.block_until_ready(run_f32_auto(v4, params4))
    ref4 = rs_gcn_reference(v4, params4)
    assert jnp.allclose(out4, ref4, atol=1e-3, rtol=1e-3)

    print("KERNEL_OK")
</pallas_src>

<mosaic_0001>
module attributes {stable_mosaic.version = 11 : i64} {
  func.func @bn_residual_kernel(%arg0: i32, %arg1: i32, %arg2: memref<1x16x256xbf16, #tpu.memory_space<vmem>>, %arg3: memref<1x16x256xf32, #tpu.memory_space<vmem>>, %arg4: memref<16x1xf32, #tpu.memory_space<vmem>>, %arg5: memref<16x1xf32, #tpu.memory_space<vmem>>, %arg6: memref<1x16x256xf32, #tpu.memory_space<vmem>>) attributes {dimension_semantics = [#tpu.dimension_semantics<parallel>, #tpu.dimension_semantics<parallel>], iteration_bounds = array<i64: 2, 1>, scalar_prefetch = 0 : i64, scratch_operands = 0 : i64, tpu.core_type = #tpu.core_type<tc>, window_params = [{transform_indices = @transform_0, window_bounds = array<i64: 1, 16, 256>}, {transform_indices = @transform_1, window_bounds = array<i64: 1, 16, 256>}, {pipeline_mode = #tpu.pipeline_mode<synchronous>, transform_indices = @transform_2, window_bounds = array<i64: 16, 1>}, {pipeline_mode = #tpu.pipeline_mode<synchronous>, transform_indices = @transform_3, window_bounds = array<i64: 16, 1>}, {transform_indices = @transform_4, window_bounds = array<i64: 1, 16, 256>}]} {
    %c0 = arith.constant 0 : index
    %c0_0 = arith.constant 0 : index
    %c0_1 = arith.constant 0 : index
    %0 = vector.load %arg2[%c0, %c0_0, %c0_1] : memref<1x16x256xbf16, #tpu.memory_space<vmem>>, vector<1x16x256xbf16>
    %1 = vector.shape_cast %0 : vector<1x16x256xbf16> to vector<16x256xbf16>
    %c0_2 = arith.constant 0 : index
    %c0_3 = arith.constant 0 : index
    %2 = vector.load %arg4[%c0_2, %c0_3] : memref<16x1xf32, #tpu.memory_space<vmem>>, vector<16x1xf32>
    %3 = arith.extf %1 : vector<16x256xbf16> to vector<16x256xf32>
    %4 = vector.broadcast %2 : vector<16x1xf32> to vector<16x256xf32>
    %5 = arith.mulf %3, %4 : vector<16x256xf32>
    %c0_4 = arith.constant 0 : index
    %c0_5 = arith.constant 0 : index
    %6 = vector.load %arg5[%c0_4, %c0_5] : memref<16x1xf32, #tpu.memory_space<vmem>>, vector<16x1xf32>
    %7 = vector.broadcast %6 : vector<16x1xf32> to vector<16x256xf32>
    %8 = arith.addf %5, %7 : vector<16x256xf32>
    %c0_6 = arith.constant 0 : index
    %c0_7 = arith.constant 0 : index
    %c0_8 = arith.constant 0 : index
    %9 = vector.load %arg3[%c0_6, %c0_7, %c0_8] : memref<1x16x256xf32, #tpu.memory_space<vmem>>, vector<1x16x256xf32>
    %10 = vector.shape_cast %9 : vector<1x16x256xf32> to vector<16x256xf32>
    %11 = arith.addf %8, %10 : vector<16x256xf32>
    %c0_9 = arith.constant 0 : index
    %c0_10 = arith.constant 0 : index
    %c0_11 = arith.constant 0 : index
    %12 = vector.load %arg6[%c0_9, %c0_10, %c0_11] : memref<1x16x256xf32, #tpu.memory_space<vmem>>, vector<1x16x256xf32>
    %13 = vector.shape_cast %12 : vector<1x16x256xf32> to vector<16x256xf32>
    %14 = vector.shape_cast %11 : vector<16x256xf32> to vector<1x16x256xf32>
    tpu.vector_store %arg6[%c0_9, %c0_10, %c0_11], %14 {strides = array<i32>} : memref<1x16x256xf32, #tpu.memory_space<vmem>>, vector<1x16x256xf32>,
    return
  }
  func.func @transform_0(%arg0: i32, %arg1: i32) -> (i32, i32, i32) {
    %c0_i32 = arith.constant 0 : i32
    %c0_i32_0 = arith.constant 0 : i32
    return %arg0, %c0_i32, %arg1 : i32, i32, i32
  }
  func.func @transform_1(%arg0: i32, %arg1: i32) -> (i32, i32, i32) {
    %c0_i32 = arith.constant 0 : i32
    %c0_i32_0 = arith.constant 0 : i32
    return %arg0, %c0_i32, %arg1 : i32, i32, i32
  }
  func.func @transform_2(%arg0: i32, %arg1: i32) -> (i32, i32) {
    %c0_i32 = arith.constant 0 : i32
    %c0_i32_0 = arith.constant 0 : i32
    %c0_i32_1 = arith.constant 0 : i32
    return %c0_i32, %c0_i32_0 : i32, i32
  }
  func.func @transform_3(%arg0: i32, %arg1: i32) -> (i32, i32) {
    %c0_i32 = arith.constant 0 : i32
    %c0_i32_0 = arith.constant 0 : i32
    %c0_i32_1 = arith.constant 0 : i32
    return %c0_i32, %c0_i32_0 : i32, i32
  }
  func.func @transform_4(%arg0: i32, %arg1: i32) -> (i32, i32, i32) {
    %c0_i32 = arith.constant 0 : i32
    %c0_i32_0 = arith.constant 0 : i32
    return %arg0, %c0_i32, %arg1 : i32, i32, i32
  }
}

module attributes {stable_mosaic.version = 11 : i64} {
  func.func @rs_gcn_kernel(%arg0: i32, %arg1: i32, %arg2: memref<1x16x256xbf16, #tpu.memory_space<vmem>>, %arg3: memref<32x16xbf16, #tpu.memory_space<vmem>>, %arg4: memref<32x1xf32, #tpu.memory_space<vmem>>, %arg5: memref<16x16xbf16, #tpu.memory_space<vmem>>, %arg6: memref<16x1xf32, #tpu.memory_space<vmem>>, %arg7: memref<16x16xbf16, #tpu.memory_space<vmem>>, %arg8: memref<16x1xf32, #tpu.memory_space<vmem>>, %arg9: memref<1x16x128xbf16, #tpu.memory_space<vmem>>, %arg10: memref<1x16x1xf32, #tpu.memory_space<vmem>>, %arg11: memref<1x16x1xf32, #tpu.memory_space<vmem>>, %arg12: memref<16x16xbf16, #tpu.memory_space<vmem>>) attributes {dimension_semantics = [#tpu.dimension_semantics<parallel>, #tpu.dimension_semantics<arbitrary>], iteration_bounds = array<i64: 2, 2>, scalar_prefetch = 0 : i64, scratch_operands = 1 : i64, tpu.core_type = #tpu.core_type<tc>, window_params = [{transform_indices = @transform_0, window_bounds = array<i64: 1, 16, 256>}, {pipeline_mode = #tpu.pipeline_mode<synchronous>, transform_indices = @transform_1, window_bounds = array<i64: 32, 16>}, {pipeline_mode = #tpu.pipeline_mode<synchronous>, transform_indices = @transform_2, window_bounds = array<i64: 32, 1>}, {pipeline_mode = #tpu.pipeline_mode<synchronous>, transform_indices = @transform_3, window_bounds = array<i64: 16, 16>}, {pipeline_mode = #tpu.pipeline_mode<synchronous>, transform_indices = @transform_4, window_bounds = array<i64: 16, 1>}, {pipeline_mode = #tpu.pipeline_mode<synchronous>, transform_indices = @transform_5, window_bounds = array<i64: 16, 16>}, {pipeline_mode = #tpu.pipeline_mode<synchronous>, transform_indices = @transform_6, window_bounds = array<i64: 16, 1>}, {transform_indices = @transform_7, window_bounds = array<i64: 1, 16, 128>}, {transform_indices = @transform_8, window_bounds = array<i64: 1, 16, 1>}, {transform_indices = @transform_9, window_bounds = array<i64: 1, 16, 1>}]} {
    %c0_i32 = arith.constant 0 : i32
    %0 = arith.cmpi eq, %arg1, %c0_i32 : i32
    %1 = arith.extui %0 : i1 to i32
    %c0_i32_0 = arith.constant 0 : i32
    %2 = arith.cmpi ne, %1, %c0_i32_0 : i32
    scf.if %2 {
      %cst_31 = arith.constant 0.000000e+00 : f32
      %43 = vector.broadcast %cst_31 : f32 to vector<1x16x1xf32>
      %c0_32 = arith.constant 0 : index
      %c0_33 = arith.constant 0 : index
      %c0_34 = arith.constant 0 : index
      %44 = vector.load %arg10[%c0_32, %c0_33, %c0_34] : memref<1x16x1xf32, #tpu.memory_space<vmem>>, vector<1x16x1xf32>
      tpu.vector_store %arg10[%c0_32, %c0_33, %c0_34], %43 {strides = array<i32>} : memref<1x16x1xf32, #tpu.memory_space<vmem>>, vector<1x16x1xf32>,
      %cst_35 = arith.constant 0.000000e+00 : f32
      %45 = vector.broadcast %cst_35 : f32 to vector<1x16x1xf32>
      %c0_36 = arith.constant 0 : index
      %c0_37 = arith.constant 0 : index
      %c0_38 = arith.constant 0 : index
      %46 = vector.load %arg11[%c0_36, %c0_37, %c0_38] : memref<1x16x1xf32, #tpu.memory_space<vmem>>, vector<1x16x1xf32>
      tpu.vector_store %arg11[%c0_36, %c0_37, %c0_38], %45 {strides = array<i32>} : memref<1x16x1xf32, #tpu.memory_space<vmem>>, vector<1x16x1xf32>,
      %cst_39 = arith.constant 0.000000e+00 : f32
      %47 = vector.broadcast %cst_39 : f32 to vector<16x16xf32>
      %c0_i32_40 = arith.constant 0 : i32
      %c2_i32 = arith.constant 2 : i32
      %48 = arith.addi %c0_i32_40, %c2_i32 : i32
      %c1_i32 = arith.constant 1 : i32
      %49 = scf.for %arg13 = %c0_i32_40 to %48 step %c1_i32 iter_args(%arg14 = %47) -> (vector<16x16xf32>)  : i32 {
        %c128_i32_44 = arith.constant 128 : i32
        %52 = arith.muli %arg13, %c128_i32_44 : i32
        %53 = tpu.assume_multiple %52, 128 : i32
        %c0_45 = arith.constant 0 : index
        %c0_46 = arith.constant 0 : index
        %54 = arith.index_cast %53 : i32 to index
        %55 = vector.load %arg2[%c0_45, %c0_46, %54] : memref<1x16x256xbf16, #tpu.memory_space<vmem>>, vector<1x16x128xbf16>
        %56 = vector.shape_cast %55 : vector<1x16x128xbf16> to vector<16x128xbf16>
        %c0_47 = arith.constant 0 : index
        %c0_48 = arith.constant 0 : index
        %57 = vector.load %arg3[%c0_47, %c0_48] : memref<32x16xbf16, #tpu.memory_space<vmem>>, vector<32x16xbf16>
        %cst_49 = arith.constant dense<0.000000e+00> : vector<32x128xf32>
        %58 = tpu.matmul %57, %56, %cst_49 {dimension_numbers = #tpu.dot_dimension_numbers<[1], [0], [0], [1], [0, 0, 1, 1], [], []>} : vector<32x16xbf16>, vector<16x128xbf16>, vector<32x128xf32> -> vector<32x128xf32>
        %c0_50 = arith.constant 0 : index
        %c0_51 = arith.constant 0 : index
        %59 = vector.load %arg4[%c0_50, %c0_51] : memref<32x1xf32, #tpu.memory_space<vmem>>, vector<32x1xf32>
        %60 = vector.broadcast %59 : vector<32x1xf32> to vector<32x128xf32>
        %61 = arith.addf %58, %60 : vector<32x128xf32>
        %62 = vector.extract_strided_slice %61 {offsets = [0, 0], sizes = [16, 128], strides = [1, 1]} : vector<32x128xf32> to vector<16x128xf32>
        %63 = arith.truncf %62 : vector<16x128xf32> to vector<16x128xbf16>
        %64 = vector.extract_strided_slice %61 {offsets = [16, 0], sizes = [16, 128], strides = [1, 1]} : vector<32x128xf32> to vector<16x128xf32>
        %65 = arith.truncf %64 : vector<16x128xf32> to vector<16x128xbf16>
        %cst_52 = arith.constant dense<0.000000e+00> : vector<16x16xf32>
        %66 = tpu.matmul %63, %65, %cst_52 {dimension_numbers = #tpu.dot_dimension_numbers<[1], [1], [0], [0], [0, 0, 1, 0], [], []>} : vector<16x128xbf16>, vector<16x128xbf16>, vector<16x16xf32> -> vector<16x16xf32>
        %67 = arith.addf %arg14, %66 : vector<16x16xf32>
        scf.yield %67 : vector<16x16xf32>
      }
      %c2_i32_41 = arith.constant 2 : i32
      %50 = arith.truncf %49 : vector<16x16xf32> to vector<16x16xbf16>
      %c0_42 = arith.constant 0 : index
      %c0_43 = arith.constant 0 : index
      %51 = vector.load %arg12[%c0_42, %c0_43] : memref<16x16xbf16, #tpu.memory_space<vmem>>, vector<16x16xbf16>
      tpu.vector_store %arg12[%c0_42, %c0_43], %50 {strides = array<i32>} : memref<16x16xbf16, #tpu.memory_space<vmem>>, vector<16x16xbf16>,
    } else {
    }
    %c128_i32 = arith.constant 128 : i32
    %3 = arith.muli %arg1, %c128_i32 : i32
    %4 = tpu.assume_multiple %3, 128 : i32
    %c0 = arith.constant 0 : index
    %c0_1 = arith.constant 0 : index
    %5 = arith.index_cast %4 : i32 to index
    %6 = vector.load %arg2[%c0, %c0_1, %5] : memref<1x16x256xbf16, #tpu.memory_space<vmem>>, vector<1x16x128xbf16>
    %7 = vector.shape_cast %6 : vector<1x16x128xbf16> to vector<16x128xbf16>
    %c0_2 = arith.constant 0 : index
    %c0_3 = arith.constant 0 : index
    %8 = vector.load %arg5[%c0_2, %c0_3] : memref<16x16xbf16, #tpu.memory_space<vmem>>, vector<16x16xbf16>
    %cst = arith.constant dense<0.000000e+00> : vector<16x128xf32>
    %9 = tpu.matmul %8, %7, %cst {dimension_numbers = #tpu.dot_dimension_numbers<[1], [0], [0], [1], [0, 0, 1, 1], [], []>} : vector<16x16xbf16>, vector<16x128xbf16>, vector<16x128xf32> -> vector<16x128xf32>
    %c0_4 = arith.constant 0 : index
    %c0_5 = arith.constant 0 : index
    %10 = vector.load %arg6[%c0_4, %c0_5] : memref<16x1xf32, #tpu.memory_space<vmem>>, vector<16x1xf32>
    %11 = vector.broadcast %10 : vector<16x1xf32> to vector<16x128xf32>
    %12 = arith.addf %9, %11 : vector<16x128xf32>
    %13 = arith.truncf %12 : vector<16x128xf32> to vector<16x128xbf16>
    %c0_6 = arith.constant 0 : index
    %c0_7 = arith.constant 0 : index
    %14 = vector.load %arg12[%c0_6, %c0_7] : memref<16x16xbf16, #tpu.memory_space<vmem>>, vector<16x16xbf16>
    %cst_8 = arith.constant dense<0.000000e+00> : vector<16x128xf32>
    %15 = tpu.matmul %14, %13, %cst_8 {dimension_numbers = #tpu.dot_dimension_numbers<[1], [0], [0], [1], [0, 0, 1, 1], [], []>} : vector<16x16xbf16>, vector<16x128xbf16>, vector<16x128xf32> -> vector<16x128xf32>
    %c0_9 = arith.constant 0 : index
    %c0_10 = arith.constant 0 : index
    %16 = vector.load %arg7[%c0_9, %c0_10] : memref<16x16xbf16, #tpu.memory_space<vmem>>, vector<16x16xbf16>
    %17 = arith.truncf %15 : vector<16x128xf32> to vector<16x128xbf16>
    %cst_11 = arith.constant dense<0.000000e+00> : vector<16x128xf32>
    %18 = tpu.matmul %16, %17, %cst_11 {dimension_numbers = #tpu.dot_dimension_numbers<[1], [0], [0], [1], [0, 0, 1, 1], [], []>} : vector<16x16xbf16>, vector<16x128xbf16>, vector<16x128xf32> -> vector<16x128xf32>
    %c0_12 = arith.constant 0 : index
    %c0_13 = arith.constant 0 : index
    %19 = vector.load %arg8[%c0_12, %c0_13] : memref<16x1xf32, #tpu.memory_space<vmem>>, vector<16x1xf32>
    %20 = vector.broadcast %19 : vector<16x1xf32> to vector<16x128xf32>
    %21 = arith.addf %18, %20 : vector<16x128xf32>
    %22 = arith.truncf %21 : vector<16x128xf32> to vector<16x128xbf16>
    %c0_14 = arith.constant 0 : index
    %c0_15 = arith.constant 0 : index
    %c0_16 = arith.constant 0 : index
    %23 = vector.load %arg9[%c0_14, %c0_15, %c0_16] : memref<1x16x128xbf16, #tpu.memory_space<vmem>>, vector<1x16x128xbf16>
    %24 = vector.shape_cast %23 : vector<1x16x128xbf16> to vector<16x128xbf16>
    %25 = vector.shape_cast %22 : vector<16x128xbf16> to vector<1x16x128xbf16>
    tpu.vector_store %arg9[%c0_14, %c0_15, %c0_16], %25 {strides = array<i32>} : memref<1x16x128xbf16, #tpu.memory_space<vmem>>, vector<1x16x128xbf16>,
    %c0_17 = arith.constant 0 : index
    %c0_18 = arith.constant 0 : index
    %c0_19 = arith.constant 0 : index
    %26 = vector.load %arg10[%c0_17, %c0_18, %c0_19] : memref<1x16x1xf32, #tpu.memory_space<vmem>>, vector<1x16x1xf32>
    %27 = vector.shape_cast %26 : vector<1x16x1xf32> to vector<16x1xf32>
    %cst_20 = arith.constant dense<0.000000e+00> : vector<16xf32>
    %28 = vector.multi_reduction <add>, %21, %cst_20 [1] : vector<16x128xf32> to vector<16xf32>
    %29 = vector.shape_cast %28 : vector<16xf32> to vector<16x1xf32>
    %30 = arith.addf %27, %29 : vector<16x1xf32>
    %c0_21 = arith.constant 0 : index
    %c0_22 = arith.constant 0 : index
    %c0_23 = arith.constant 0 : index
    %31 = vector.load %arg10[%c0_21, %c0_22, %c0_23] : memref<1x16x1xf32, #tpu.memory_space<vmem>>, vector<1x16x1xf32>
    %32 = vector.shape_cast %31 : vector<1x16x1xf32> to vector<16x1xf32>
    %33 = vector.shape_cast %30 : vector<16x1xf32> to vector<1x16x1xf32>
    tpu.vector_store %arg10[%c0_21, %c0_22, %c0_23], %33 {strides = array<i32>} : memref<1x16x1xf32, #tpu.memory_space<vmem>>, vector<1x16x1xf32>,
    %c0_24 = arith.constant 0 : index
    %c0_25 = arith.constant 0 : index
    %c0_26 = arith.constant 0 : index
    %34 = vector.load %arg11[%c0_24, %c0_25, %c0_26] : memref<1x16x1xf32, #tpu.memory_space<vmem>>, vector<1x16x1xf32>
    %35 = vector.shape_cast %34 : vector<1x16x1xf32> to vector<16x1xf32>
    %36 = arith.mulf %21, %21 : vector<16x128xf32>
    %cst_27 = arith.constant dense<0.000000e+00> : vector<16xf32>
    %37 = vector.multi_reduction <add>, %36, %cst_27 [1] : vector<16x128xf32> to vector<16xf32>
    %38 = vector.shape_cast %37 : vector<16xf32> to vector<16x1xf32>
    %39 = arith.addf %35, %38 : vector<16x1xf32>
    %c0_28 = arith.constant 0 : index
    %c0_29 = arith.constant 0 : index
    %c0_30 = arith.constant 0 : index
    %40 = vector.load %arg11[%c0_28, %c0_29, %c0_30] : memref<1x16x1xf32, #tpu.memory_space<vmem>>, vector<1x16x1xf32>
    %41 = vector.shape_cast %40 : vector<1x16x1xf32> to vector<16x1xf32>
    %42 = vector.shape_cast %39 : vector<16x1xf32> to vector<1x16x1xf32>
    tpu.vector_store %arg11[%c0_28, %c0_29, %c0_30], %42 {strides = array<i32>} : memref<1x16x1xf32, #tpu.memory_space<vmem>>, vector<1x16x1xf32>,
    return
  }
  func.func @transform_0(%arg0: i32, %arg1: i32) -> (i32, i32, i32) {
    %c0_i32 = arith.constant 0 : i32
    %c0_i32_0 = arith.constant 0 : i32
    %c0_i32_1 = arith.constant 0 : i32
    return %arg0, %c0_i32, %c0_i32_0 : i32, i32, i32
  }
  func.func @transform_1(%arg0: i32, %arg1: i32) -> (i32, i32) {
    %c0_i32 = arith.constant 0 : i32
    %c0_i32_0 = arith.constant 0 : i32
    %c0_i32_1 = arith.constant 0 : i32
    return %c0_i32, %c0_i32_0 : i32, i32
  }
  func.func @transform_2(%arg0: i32, %arg1: i32) -> (i32, i32) {
    %c0_i32 = arith.constant 0 : i32
    %c0_i32_0 = arith.constant 0 : i32
    %c0_i32_1 = arith.constant 0 : i32
    return %c0_i32, %c0_i32_0 : i32, i32
  }
  func.func @transform_3(%arg0: i32, %arg1: i32) -> (i32, i32) {
    %c0_i32 = arith.constant 0 : i32
    %c0_i32_0 = arith.constant 0 : i32
    %c0_i32_1 = arith.constant 0 : i32
    return %c0_i32, %c0_i32_0 : i32, i32
  }
  func.func @transform_4(%arg0: i32, %arg1: i32) -> (i32, i32) {
    %c0_i32 = arith.constant 0 : i32
    %c0_i32_0 = arith.constant 0 : i32
    %c0_i32_1 = arith.constant 0 : i32
    return %c0_i32, %c0_i32_0 : i32, i32
  }
  func.func @transform_5(%arg0: i32, %arg1: i32) -> (i32, i32) {
    %c0_i32 = arith.constant 0 : i32
    %c0_i32_0 = arith.constant 0 : i32
    %c0_i32_1 = arith.constant 0 : i32
    return %c0_i32, %c0_i32_0 : i32, i32
  }
  func.func @transform_6(%arg0: i32, %arg1: i32) -> (i32, i32) {
    %c0_i32 = arith.constant 0 : i32
    %c0_i32_0 = arith.constant 0 : i32
    %c0_i32_1 = arith.constant 0 : i32
    return %c0_i32, %c0_i32_0 : i32, i32
  }
  func.func @transform_7(%arg0: i32, %arg1: i32) -> (i32, i32, i32) {
    %c0_i32 = arith.constant 0 : i32
    %c0_i32_0 = arith.constant 0 : i32
    return %arg0, %c0_i32, %arg1 : i32, i32, i32
  }
  func.func @transform_8(%arg0: i32, %arg1: i32) -> (i32, i32, i32) {
    %c0_i32 = arith.constant 0 : i32
    %c0_i32_0 = arith.constant 0 : i32
    %c0_i32_1 = arith.constant 0 : i32
    return %arg0, %c0_i32, %c0_i32_0 : i32, i32, i32
  }
  func.func @transform_9(%arg0: i32, %arg1: i32) -> (i32, i32, i32) {
    %c0_i32 = arith.constant 0 : i32
    %c0_i32_0 = arith.constant 0 : i32
    %c0_i32_1 = arith.constant 0 : i32
    return %arg0, %c0_i32, %c0_i32_0 : i32, i32, i32
  }
}

</mosaic_0001>

<llo_original>
// kernel: rs_gcn_pallas.3
$region0: #{rs_gcn_pallas.3}
  #allocation0 [shape = 'u32[]', space=smem, size = 0x4, offset = 0x4, fixed_abs, tag = 'smem constant byte address 0x4 - core index']
  #allocation1 [shape = 'u32[144,128]{1,0:T(1,128)}', space=vmem, size = 0x12000, scoped, tag = 'internal scratch']
  %s0 = inlined_call_operand.vmem [shape: bf16[2,16,256], index: 0, kind: input, shape index: {}]
  %s1 = inlined_call_operand.vmem [shape: f32[2,16,256], index: 1, kind: input, shape index: {}]
  %s2 = inlined_call_operand.vmem [shape: f32[16,1], index: 2, kind: input, shape index: {}]
  %s3 = inlined_call_operand.vmem [shape: f32[16,1], index: 3, kind: input, shape index: {}]
  %s4 = inlined_call_operand.hbm [shape: f32[2,16,256], index: 4, kind: output, shape index: {}]
  %s5 = sld [smem:[#allocation0]]
  $region49: #{rs_gcn_pallas.3} parent=0
    _
  %s7 = ssub.s32 1, %s5
  %s8 = scalar_select 0, %s7, %s5
  $region1: #{rs_gcn_pallas.3} parent=0
    #allocation2 [shape = 'u8[32768]{0}', space=vmem, size = 0x8000, scoped, tag = 'output window, operand 0']
    #allocation3 [shape = 's32[2]{0}', space=sflag, size = 0x8, scoped, tag = 'scoped memory for rs_gcn_pallas.3']
    %9 = vsyncpa [#allocation3], 0
    %s10 = scalar_lea.sflag [#allocation3], 1
    %11 = vsyncpa %s10, 0
    loop: start=0, step=1, limit=4
    $region2: #{rs_gcn_pallas.3} parent=1 // loop_pre_header
      _
    $region3: #{rs_gcn_pallas.3} parent=1 // loop_header
      %s13 = sphi 0, %s17
      %p14 = scmp.ge.s32.totalorder %s13, 4
      %s20 = sphi 0, %s32
      %s21 = sphi 0, %s28
      %s22 = sphi 0, %s20
      %s23 = sphi 0, %s21
      %s24 = sphi 0, %s22
      %s25 = sphi 0, %s23
      %s37 = sphi 0, %s39
      %s40 = sphi 0, %s37
      %s41 = sphi 0, %s40
      %s57 = sphi 0, %s41
      %s65 = sphi 0, %s67
      %s68 = sphi 0, %s65
      %s69 = sphi 0, %s68
      %s85 = sphi 0, %s69
      %s89 = sphi 0, %s89
      %s91 = sphi 0, %s89
      %s92 = sphi 0, %s91
      %s106 = sphi 0, %s92
      %s110 = sphi 0, %s110
      %s112 = sphi 0, %s110
      %s113 = sphi 0, %s112
      %s127 = sphi 0, %s113
      %s135 = sphi 0, %s137
      %s138 = sphi 0, %s135
      %s139 = sphi 0, %s138
      %s155 = sphi 0, %s139
    $region4: #{rs_gcn_pallas.3} parent=1 // loop_header_branch
      %16 = sbr.rel (%p14) target = $region8
    $region5: #{rs_gcn_pallas.3} parent=1 // loop_body
      %s18 = ssub.s32 %s13, 1
      %s19 = ssub.s32 %s13, 2
      %s26 = sadd.s32 1, %s21
      %p27 = scmp.ge.s32.totalorder %s26, 1
      %s28 = scalar_select %p27, 0, %s26
      %s29 = sadd.s32 1, %s20
      %s30 = scalar_select %p27, %s29, %s20
      %p31 = scmp.ge.s32.totalorder %s30, 2
      %s32 = scalar_select %p31, 0, %s30
      %s33 = ssub.s32 %s20, %s32
      %s34 = ssub.s32 %s21, %s28
      %s35 = sor.u32 %s33, %s34
      %p36 = scmp.eq.s32.totalorder %s35, 0
      %s38 = sadd.s32 %s37, 1
      %s39 = scalar_select %p36, %s37, %s38
      %p42 = pneg %p36
      %p43 = scmp.eq.s32.totalorder %s13, 1
      %p44 = por %p42, %p43
      %p45 = scmp.ne.s32.totalorder %s37, %s40
      %p46 = scmp.eq.s32.totalorder %s13, 0
      %p47 = por %p45, %p46
      %p48 = scmp.ne.s32.totalorder %s37, %s40
      %p49 = scmp.eq.s32.totalorder %s18, 1
      %p50 = por %p48, %p49
      %p51 = scmp.ne.s32.totalorder %s40, %s41
      %p52 = scmp.eq.s32.totalorder %s18, 0
      %p53 = por %p51, %p52
      %p54 = scmp.ne.s32.totalorder %s40, %s41
      %p55 = scmp.eq.s32.totalorder %s19, 1
      %p56 = por %p54, %p55
      %p58 = scmp.ne.s32.totalorder %s41, %s57
      %p59 = scmp.eq.s32.totalorder %s19, 0
      %p60 = por %p58, %p59
      %s61 = ssub.s32 %s20, %s32
      %s62 = ssub.s32 %s21, %s28
      %s63 = sor.u32 %s61, %s62
      %p64 = scmp.eq.s32.totalorder %s63, 0
      %s66 = sadd.s32 %s65, 1
      %s67 = scalar_select %p64, %s65, %s66
      %p70 = pneg %p64
      %p71 = scmp.eq.s32.totalorder %s13, 1
      %p72 = por %p70, %p71
      %p73 = scmp.ne.s32.totalorder %s65, %s68
      %p74 = scmp.eq.s32.totalorder %s13, 0
      %p75 = por %p73, %p74
      %p76 = scmp.ne.s32.totalorder %s65, %s68
      %p77 = scmp.eq.s32.totalorder %s18, 1
      %p78 = por %p76, %p77
      %p79 = scmp.ne.s32.totalorder %s68, %s69
      %p80 = scmp.eq.s32.totalorder %s18, 0
      %p81 = por %p79, %p80
      %p82 = scmp.ne.s32.totalorder %s68, %s69
      %p83 = scmp.eq.s32.totalorder %s19, 1
      %p84 = por %p82, %p83
      %p86 = scmp.ne.s32.totalorder %s69, %s85
      %p87 = scmp.eq.s32.totalorder %s19, 0
      %p88 = por %p86, %p87
      %s90 = sadd.s32 %s89, 1
      %p93 = scmp.eq.s32.totalorder %s13, 1
      %p94 = scmp.ne.s32.totalorder %s89, %s91
      %p95 = scmp.eq.s32.totalorder %s13, 0
      %p96 = por %p94, %p95
      %p97 = scmp.ne.s32.totalorder %s89, %s91
      %p98 = scmp.eq.s32.totalorder %s18, 1
      %p99 = por %p97, %p98
      %p100 = scmp.ne.s32.totalorder %s91, %s92
      %p101 = scmp.eq.s32.totalorder %s18, 0
      %p102 = por %p100, %p101
      %p103 = scmp.ne.s32.totalorder %s91, %s92
      %p104 = scmp.eq.s32.totalorder %s19, 1
      %p105 = por %p103, %p104
      %p107 = scmp.ne.s32.totalorder %s92, %s106
      %p108 = scmp.eq.s32.totalorder %s19, 0
      %p109 = por %p107, %p108
      %s111 = sadd.s32 %s110, 1
      %p114 = scmp.eq.s32.totalorder %s13, 1
      %p115 = scmp.ne.s32.totalorder %s110, %s112
      %p116 = scmp.eq.s32.totalorder %s13, 0
      %p117 = por %p115, %p116
      %p118 = scmp.ne.s32.totalorder %s110, %s112
      %p119 = scmp.eq.s32.totalorder %s18, 1
      %p120 = por %p118, %p119
      %p121 = scmp.ne.s32.totalorder %s112, %s113
      %p122 = scmp.eq.s32.totalorder %s18, 0
      %p123 = por %p121, %p122
      %p124 = scmp.ne.s32.totalorder %s112, %s113
      %p125 = scmp.eq.s32.totalorder %s19, 1
      %p126 = por %p124, %p125
      %p128 = scmp.ne.s32.totalorder %s113, %s127
      %p129 = scmp.eq.s32.totalorder %s19, 0
      %p130 = por %p128, %p129
      %s131 = ssub.s32 %s20, %s32
      %s132 = ssub.s32 %s21, %s28
      %s133 = sor.u32 %s131, %s132
      %p134 = scmp.eq.s32.totalorder %s133, 0
      %s136 = sadd.s32 %s135, 1
      %s137 = scalar_select %p134, %s135, %s136
      %p140 = pneg %p134
      %p141 = scmp.eq.s32.totalorder %s13, 1
      %p142 = por %p140, %p141
      %p143 = scmp.ne.s32.totalorder %s135, %s138
      %p144 = scmp.eq.s32.totalorder %s13, 0
      %p145 = por %p143, %p144
      %p146 = scmp.ne.s32.totalorder %s135, %s138
      %p147 = scmp.eq.s32.totalorder %s18, 1
      %p148 = por %p146, %p147
      %p149 = scmp.ne.s32.totalorder %s138, %s139
      %p150 = scmp.eq.s32.totalorder %s18, 0
      %p151 = por %p149, %p150
      %p152 = scmp.ne.s32.totalorder %s138, %s139
      %p153 = scmp.eq.s32.totalorder %s19, 1
      %p154 = por %p152, %p153
      %p156 = scmp.ne.s32.totalorder %s139, %s155
      %p157 = scmp.eq.s32.totalorder %s19, 0
      %p158 = por %p156, %p157
      %p159 = scmp.le.s32.totalorder 1, %s13
      %p160 = scmp.lt.s32.totalorder %s13, 3
      %p161 = pnand %p159, %p160
      %p162 = pneg %p161
      // Predicated region
      $region9: #{rs_gcn_pallas.3} parent=5 // pred_check
        _
      $region10: #{rs_gcn_pallas.3} parent=5 // pred_check_branch
        %164 = sbr.rel (%p161) target = $region12
      $region11: #{rs_gcn_pallas.3} parent=5 // pred_region
        %s165 = ssub.s32 %s13, 1
        // Predicated region
        $region13: #{rs_gcn_pallas.3} parent=11 // pred_check
          %p166 = pneg %p102
        $region14: #{rs_gcn_pallas.3} parent=11 // pred_check_branch
          %168 = sbr.rel (%p166) target = $region16
        $region15: #{rs_gcn_pallas.3} parent=11 // pred_region
          _
        $region16: #{rs_gcn_pallas.3} parent=11 // pred_fallthru
          _
        // Predicated region
        $region17: #{rs_gcn_pallas.3} parent=11 // pred_check
          %p169 = pneg %p123
        $region18: #{rs_gcn_pallas.3} parent=11 // pred_check_branch
          %171 = sbr.rel (%p169) target = $region20
        $region19: #{rs_gcn_pallas.3} parent=11 // pred_region
          _
        $region20: #{rs_gcn_pallas.3} parent=11 // pred_fallthru
          _
      $region12: #{rs_gcn_pallas.3} parent=5 // pred_fallthru
        _
      %p172 = scmp.lt.s32.totalorder %s13, 2
      // Predicated region
      $region21: #{rs_gcn_pallas.3} parent=5 // pred_check
        %p173 = pneg %p172
      $region22: #{rs_gcn_pallas.3} parent=5 // pred_check_branch
        %175 = sbr.rel (%p173) target = $region24
      $region23: #{rs_gcn_pallas.3} parent=5 // pred_region
        // Predicated region
        $region25: #{rs_gcn_pallas.3} parent=23 // pred_check
          %p176 = pneg %p47
        $region26: #{rs_gcn_pallas.3} parent=23 // pred_check_branch
          %178 = sbr.rel (%p176) target = $region28
        $region27: #{rs_gcn_pallas.3} parent=23 // pred_region
          %s179 = smul.u32 2, %s21
          %p180 = scmp.lt.s32.totalorder %s20, 1
          %s181 = scalar_select %p180, %s20, 1
          %p182 = scmp.lt.s32.totalorder %s179, 1
          %s183 = scalar_select %p182, %s179, 1
          %s184 = smul.addr %s181, 4
          %s185 = sadd.s32 %s183, %s184
          %s186 = smul.addr %s185, 4
          %s187 = scalar_lea.vmem %s0, %s186
          %s188 = smul.u32 2, %s21
        $region28: #{rs_gcn_pallas.3} parent=23 // pred_fallthru
          _
        // Predicated region
        $region29: #{rs_gcn_pallas.3} parent=23 // pred_check
          %p189 = pneg %p75
        $region30: #{rs_gcn_pallas.3} parent=23 // pred_check_branch
          %191 = sbr.rel (%p189) target = $region32
        $region31: #{rs_gcn_pallas.3} parent=23 // pred_region
          %s192 = smul.u32 2, %s21
          %p193 = scmp.lt.s32.totalorder %s20, 1
          %s194 = scalar_select %p193, %s20, 1
          %p195 = scmp.lt.s32.totalorder %s192, 1
          %s196 = scalar_select %p195, %s192, 1
          %s197 = smul.addr %s194, 4
          %s198 = sadd.s32 %s196, %s197
          %s199 = smul.addr %s198, 8
          %s200 = scalar_lea.vmem %s1, %s199
          %s201 = smul.u32 2, %s21
        $region32: #{rs_gcn_pallas.3} parent=23 // pred_fallthru
          _
      $region24: #{rs_gcn_pallas.3} parent=5 // pred_fallthru
        _
      %p202 = scmp.le.s32.totalorder 1, %s13
      %p203 = scmp.lt.s32.totalorder %s13, 3
      %p204 = pnand %p202, %p203
      %p205 = pneg %p204
      // Predicated region
      $region33: #{rs_gcn_pallas.3} parent=5 // pred_check
        _
      $region34: #{rs_gcn_pallas.3} parent=5 // pred_check_branch
        %207 = sbr.rel (%p204) target = $region36
      $region35: #{rs_gcn_pallas.3} parent=5 // pred_region
        %s208 = ssub.s32 %s13, 1
        %s209 = smul.u32 2, %s23
        %p210 = scmp.lt.s32.totalorder %s22, 1
        %s211 = scalar_select %p210, %s22, 1
        %p212 = scmp.lt.s32.totalorder %s209, 1
        %s213 = scalar_select %p212, %s209, 1
        %s214 = smul.addr %s211, 4
        %s215 = sadd.s32 %s213, %s214
        %s216 = smul.addr %s215, 4
        %s217 = scalar_lea.vmem %s0, %s216
        %p218 = pneg %p53
        %p219 = pneg %p50
        %s220 = smul.u32 2, %s23
        %p221 = scmp.lt.s32.totalorder %s22, 1
        %s222 = scalar_select %p221, %s22, 1
        %p223 = scmp.lt.s32.totalorder %s220, 1
        %s224 = scalar_select %p223, %s220, 1
        %s225 = smul.addr %s222, 4
        %s226 = sadd.s32 %s224, %s225
        %s227 = smul.addr %s226, 8
        %s228 = scalar_lea.vmem %s1, %s227
        %p229 = pneg %p81
        %p230 = pneg %p78
        %p231 = pneg %p102
        %p232 = pneg %p99
        %p233 = pneg %p123
        %p234 = pneg %p120
        %p235 = pneg %p151
        %p236 = pneg %p148
        %s237 = sand.u32 %s138, 1
        %s238 = scalar_lea.sflag [#allocation3], %s237
        %s239 = sand.u32 %s138, 1
        %s240 = smul.addr %s239, 32
        %s241 = scalar_lea.vmem [#allocation2], %s240
        %s242 = smul.u32 2, %s23
        %p243 = scmp.lt.s32.totalorder %s22, 1
        %s244 = scalar_select %p243, %s22, 1
        %p245 = scmp.lt.s32.totalorder %s242, 1
        %s246 = scalar_select %p245, %s242, 1
        %s247 = smul.addr %s244, 4
        %s248 = sadd.s32 %s246, %s247
        %s249 = smul.addr %s248, 4
        %s250 = scalar_lea.vmem %s0, %s249
        %s251 = smul.u32 2, %s23
        %s252 = smul.u32 2, %s23
        %p253 = scmp.lt.s32.totalorder %s22, 1
        %s254 = scalar_select %p253, %s22, 1
        %p255 = scmp.lt.s32.totalorder %s252, 1
        %s256 = scalar_select %p255, %s252, 1
        %s257 = smul.addr %s254, 4
        %s258 = sadd.s32 %s256, %s257
        %s259 = smul.addr %s258, 8
        %s260 = scalar_lea.vmem %s1, %s259
        %s261 = smul.u32 2, %s23
        %s262 = smul.u32 2, %s23
        %v263 = vld [vmem:[%s250] sm:$0xff]
        %v264 = vld [vmem:[%s250 + $0x8] sm:$0xff]
        %v265 = vld [vmem:[%s2] sm:$0xff]
        %v266 = vld [vmem:[%s2 + $0x8] sm:$0xff]
        %v267 = vunpack.c.l.bf16 %v263
        %v268 = vunpack.c.h.bf16 %v263
        %v269 = vunpack.c.l.bf16 %v264
        %v270 = vunpack.c.h.bf16 %v264
        %272 = vset.pattern.permute.xlu0 0
        %273 = vperm.xlu0 %272, %v265
        %v274 = vpop.permute.xlu0 %273
        %277 = vset.pattern.permute.xlu0 0
        %278 = vperm.xlu0 %277, %v266
        %v279 = vpop.permute.xlu0 %278
        %v281 = vmul.f32 %v267, %v274
        %v282 = vmul.f32 %v268, %v274
        %v283 = vmul.f32 %v269, %v279
        %v284 = vmul.f32 %v270, %v279
        %v285 = vld [vmem:[%s3] sm:$0xff]
        %v286 = vld [vmem:[%s3 + $0x8] sm:$0xff]
        %288 = vset.pattern.permute.xlu0 0
        %289 = vperm.xlu0 %288, %v285
        %v290 = vpop.permute.xlu0 %289
        %293 = vset.pattern.permute.xlu0 0
        %294 = vperm.xlu0 %293, %v286
        %v295 = vpop.permute.xlu0 %294
        %v297 = vadd.f32 %v281, %v290
        %v298 = vadd.f32 %v282, %v290
        %v299 = vadd.f32 %v283, %v295
        %v300 = vadd.f32 %v284, %v295
        %v301 = vld [vmem:[%s260] sm:$0xff]
        %v302 = vld [vmem:[%s260 + $0x8] sm:$0xff]
        %v303 = vld [vmem:[%s260 + $0x10] sm:$0xff]
        %v304 = vld [vmem:[%s260 + $0x18] sm:$0xff]
        %v305 = vadd.f32 %v297, %v301
        %v306 = vadd.f32 %v298, %v302
        %v307 = vadd.f32 %v299, %v303
        %v308 = vadd.f32 %v300, %v304
        %309 = vst [vmem:[%s241] sm:$0xff] %v305
        %310 = vst [vmem:[%s241 + $0x8] sm:$0xff] %v306
        %311 = vst [vmem:[%s241 + $0x10] sm:$0xff] %v307
        %312 = vst [vmem:[%s241 + $0x18] sm:$0xff] %v308
        %s313 = sand.u32 %s138, 1
        %s314 = scalar_lea.sflag [#allocation3], %s313
        %s315 = sand.u32 %s138, 1
        %s316 = smul.addr %s315, 32
        %s317 = scalar_lea.vmem [#allocation2], %s316
        // Predicated region
        $region37: #{rs_gcn_pallas.3} parent=35 // pred_check
          %p318 = pneg %p148
        $region38: #{rs_gcn_pallas.3} parent=35 // pred_check_branch
          %320 = sbr.rel (%p318) target = $region40
        $region39: #{rs_gcn_pallas.3} parent=35 // pred_region
          %s321 = smul.u32 2, %s23
          %s323 = ssub.s32 512, 512
          %324 = vsyncadd %s314, %s323
          %s325 = smul.addr %s22, 4
          %s326 = sadd.s32 %s321, %s325
          %s327 = smul.addr %s326, 128
          %s328 = scalar_lea.hbm %s4, %s327
          %s329 = sshll.u32 %s317, 4
          %s330 = int_to_ptr.vmem [resolvable:$true] %s329
          %335 = dma.vmem_to_hbm [thread:$0]  %s330, 512, %s328, %s314, 256, 256, 16
        $region40: #{rs_gcn_pallas.3} parent=35 // pred_fallthru
          _
      $region36: #{rs_gcn_pallas.3} parent=5 // pred_fallthru
        _
      %p336 = scmp.le.s32.totalorder 2, %s13
      // Predicated region
      $region41: #{rs_gcn_pallas.3} parent=5 // pred_check
        %p337 = pneg %p336
      $region42: #{rs_gcn_pallas.3} parent=5 // pred_check_branch
        %339 = sbr.rel (%p337) target = $region44
      $region43: #{rs_gcn_pallas.3} parent=5 // pred_region
        %s340 = ssub.s32 %s13, 2
        // Predicated region
        $region45: #{rs_gcn_pallas.3} parent=43 // pred_check
          %p341 = pneg %p154
        $region46: #{rs_gcn_pallas.3} parent=43 // pred_check_branch
          %343 = sbr.rel (%p341) target = $region48
        $region47: #{rs_gcn_pallas.3} parent=43 // pred_region
          %s344 = sand.u32 %s139, 1
          %s345 = scalar_lea.sflag [#allocation3], %s344
          %s346 = sand.u32 %s139, 1
          %s347 = smul.addr %s346, 32
          %s348 = scalar_lea.vmem [#allocation2], %s347
          %349 = dma.done %s345, 512
        $region48: #{rs_gcn_pallas.3} parent=43 // pred_fallthru
          _
      $region44: #{rs_gcn_pallas.3} parent=5 // pred_fallthru
        _
    $region6: #{rs_gcn_pallas.3} parent=1 // loop_footer
      %s17 = sadd.s32 1, %s13
    $region7: #{rs_gcn_pallas.3} parent=1 // loop_footer_branch
      %12 = sbr.rel target = $region3
    $region8: #{rs_gcn_pallas.3} parent=1 // loop_exit
      _
    %350 = vsyncpa [#allocation3], 1
    %s351 = scalar_lea.sflag [#allocation3], 1
    %352 = vsyncpa %s351, 1

// kernel: rs_gcn_pallas.2
$region0: #{rs_gcn_pallas.2}
  #allocation0 [shape = 'u32[]', space=smem, size = 0x4, offset = 0x4, fixed_abs, tag = 'smem constant byte address 0x4 - core index']
  #allocation1 [shape = 'u32[144,128]{1,0:T(1,128)}', space=vmem, size = 0x12000, scoped, tag = 'internal scratch']
  #allocation2 [shape = 'bf16[16,16]{1,0:T(16,128)(2,1)}', space=vmem, size = 0x1000, scoped, tag = 'scratch operand']
  %s0 = inlined_call_operand.vmem [shape: bf16[2,16,256], index: 0, kind: input, shape index: {}]
  %s1 = inlined_call_operand.vmem [shape: bf16[32,16], index: 1, kind: input, shape index: {}]
  %s2 = inlined_call_operand.vmem [shape: f32[32,1], index: 2, kind: input, shape index: {}]
  %s3 = inlined_call_operand.vmem [shape: bf16[16,16], index: 3, kind: input, shape index: {}]
  %s4 = inlined_call_operand.vmem [shape: f32[16,1], index: 4, kind: input, shape index: {}]
  %s5 = inlined_call_operand.vmem [shape: bf16[16,16], index: 5, kind: input, shape index: {}]
  %s6 = inlined_call_operand.vmem [shape: f32[16,1], index: 6, kind: input, shape index: {}]
  %s7 = inlined_call_operand.vmem [shape: bf16[2,16,256], index: 7, kind: output, shape index: {0}]
  %s8 = inlined_call_operand.vmem [shape: f32[2,16,1], index: 8, kind: output, shape index: {1}]
  %s9 = inlined_call_operand.vmem [shape: f32[2,16,1], index: 9, kind: output, shape index: {2}]
  %10 = xla_tuple %s7, %s8, %s9
  %s11 = sld [smem:[#allocation0]]
  $region125: #{rs_gcn_pallas.2} parent=0
    _
  %s13 = ssub.s32 1, %s11
  %s14 = scalar_select 0, %s13, %s11
  $region1: #{rs_gcn_pallas.2} parent=0
    #allocation3 [shape = 'u8[8192]{0}', space=vmem, size = 0x2000, scoped, tag = 'output window, operand 0']
    loop: start=0, step=1, limit=6
    $region2: #{rs_gcn_pallas.2} parent=1 // loop_pre_header
      _
    $region3: #{rs_gcn_pallas.2} parent=1 // loop_header
      %s16 = sphi 0, %s20
      %p17 = scmp.ge.s32.totalorder %s16, 6
      %s23 = sphi 0, %s35
      %s24 = sphi 0, %s31
      %s25 = sphi 0, %s23
      %s26 = sphi 0, %s24
      %s27 = sphi 0, %s25
      %s28 = sphi 0, %s26
      %s38 = sphi 0, %s40
      %s41 = sphi 0, %s38
      %s42 = sphi 0, %s41
      %s58 = sphi 0, %s42
      %s62 = sphi 0, %s62
      %s64 = sphi 0, %s62
      %s65 = sphi 0, %s64
      %s79 = sphi 0, %s65
      %s83 = sphi 0, %s83
      %s85 = sphi 0, %s83
      %s86 = sphi 0, %s85
      %s100 = sphi 0, %s86
      %s104 = sphi 0, %s104
      %s106 = sphi 0, %s104
      %s107 = sphi 0, %s106
      %s121 = sphi 0, %s107
      %s125 = sphi 0, %s125
      %s127 = sphi 0, %s125
      %s128 = sphi 0, %s127
      %s142 = sphi 0, %s128
      %s146 = sphi 0, %s146
      %s148 = sphi 0, %s146
      %s149 = sphi 0, %s148
      %s163 = sphi 0, %s149
      %s167 = sphi 0, %s167
      %s169 = sphi 0, %s167
      %s170 = sphi 0, %s169
      %s184 = sphi 0, %s170
      %s192 = sphi 0, %s194
      %s195 = sphi 0, %s192
      %s196 = sphi 0, %s195
      %s212 = sphi 0, %s196
      %s218 = sphi 0, %s220
      %s221 = sphi 0, %s218
      %s222 = sphi 0, %s221
      %s238 = sphi 0, %s222
      %s244 = sphi 0, %s246
      %s247 = sphi 0, %s244
      %s248 = sphi 0, %s247
      %s264 = sphi 0, %s248
    $region4: #{rs_gcn_pallas.2} parent=1 // loop_header_branch
      %19 = sbr.rel (%p17) target = $region8
    $region5: #{rs_gcn_pallas.2} parent=1 // loop_body
      %s21 = ssub.s32 %s16, 1
      %s22 = ssub.s32 %s16, 2
      %s29 = sadd.s32 1, %s24
      %p30 = scmp.ge.s32.totalorder %s29, 2
      %s31 = scalar_select %p30, 0, %s29
      %s32 = sadd.s32 1, %s23
      %s33 = scalar_select %p30, %s32, %s23
      %p34 = scmp.ge.s32.totalorder %s33, 2
      %s35 = scalar_select %p34, 0, %s33
      %s36 = ssub.s32 %s23, %s35
      %p37 = scmp.eq.s32.totalorder %s36, 0
      %s39 = sadd.s32 %s38, 1
      %s40 = scalar_select %p37, %s38, %s39
      %p43 = pneg %p37
      %p44 = scmp.eq.s32.totalorder %s16, 3
      %p45 = por %p43, %p44
      %p46 = scmp.ne.s32.totalorder %s38, %s41
      %p47 = scmp.eq.s32.totalorder %s16, 0
      %p48 = por %p46, %p47
      %p49 = scmp.ne.s32.totalorder %s38, %s41
      %p50 = scmp.eq.s32.totalorder %s21, 3
      %p51 = por %p49, %p50
      %p52 = scmp.ne.s32.totalorder %s41, %s42
      %p53 = scmp.eq.s32.totalorder %s21, 0
      %p54 = por %p52, %p53
      %p55 = scmp.ne.s32.totalorder %s41, %s42
      %p56 = scmp.eq.s32.totalorder %s22, 3
      %p57 = por %p55, %p56
      %p59 = scmp.ne.s32.totalorder %s42, %s58
      %p60 = scmp.eq.s32.totalorder %s22, 0
      %p61 = por %p59, %p60
      %s63 = sadd.s32 %s62, 1
      %p66 = scmp.eq.s32.totalorder %s16, 3
      %p67 = scmp.ne.s32.totalorder %s62, %s64
      %p68 = scmp.eq.s32.totalorder %s16, 0
      %p69 = por %p67, %p68
      %p70 = scmp.ne.s32.totalorder %s62, %s64
      %p71 = scmp.eq.s32.totalorder %s21, 3
      %p72 = por %p70, %p71
      %p73 = scmp.ne.s32.totalorder %s64, %s65
      %p74 = scmp.eq.s32.totalorder %s21, 0
      %p75 = por %p73, %p74
      %p76 = scmp.ne.s32.totalorder %s64, %s65
      %p77 = scmp.eq.s32.totalorder %s22, 3
      %p78 = por %p76, %p77
      %p80 = scmp.ne.s32.totalorder %s65, %s79
      %p81 = scmp.eq.s32.totalorder %s22, 0
      %p82 = por %p80, %p81
      %s84 = sadd.s32 %s83, 1
      %p87 = scmp.eq.s32.totalorder %s16, 3
      %p88 = scmp.ne.s32.totalorder %s83, %s85
      %p89 = scmp.eq.s32.totalorder %s16, 0
      %p90 = por %p88, %p89
      %p91 = scmp.ne.s32.totalorder %s83, %s85
      %p92 = scmp.eq.s32.totalorder %s21, 3
      %p93 = por %p91, %p92
      %p94 = scmp.ne.s32.totalorder %s85, %s86
      %p95 = scmp.eq.s32.totalorder %s21, 0
      %p96 = por %p94, %p95
      %p97 = scmp.ne.s32.totalorder %s85, %s86
      %p98 = scmp.eq.s32.totalorder %s22, 3
      %p99 = por %p97, %p98
      %p101 = scmp.ne.s32.totalorder %s86, %s100
      %p102 = scmp.eq.s32.totalorder %s22, 0
      %p103 = por %p101, %p102
      %s105 = sadd.s32 %s104, 1
      %p108 = scmp.eq.s32.totalorder %s16, 3
      %p109 = scmp.ne.s32.totalorder %s104, %s106
      %p110 = scmp.eq.s32.totalorder %s16, 0
      %p111 = por %p109, %p110
      %p112 = scmp.ne.s32.totalorder %s104, %s106
      %p113 = scmp.eq.s32.totalorder %s21, 3
      %p114 = por %p112, %p113
      %p115 = scmp.ne.s32.totalorder %s106, %s107
      %p116 = scmp.eq.s32.totalorder %s21, 0
      %p117 = por %p115, %p116
      %p118 = scmp.ne.s32.totalorder %s106, %s107
      %p119 = scmp.eq.s32.totalorder %s22, 3
      %p120 = por %p118, %p119
      %p122 = scmp.ne.s32.totalorder %s107, %s121
      %p123 = scmp.eq.s32.totalorder %s22, 0
      %p124 = por %p122, %p123
      %s126 = sadd.s32 %s125, 1
      %p129 = scmp.eq.s32.totalorder %s16, 3
      %p130 = scmp.ne.s32.totalorder %s125, %s127
      %p131 = scmp.eq.s32.totalorder %s16, 0
      %p132 = por %p130, %p131
      %p133 = scmp.ne.s32.totalorder %s125, %s127
      %p134 = scmp.eq.s32.totalorder %s21, 3
      %p135 = por %p133, %p134
      %p136 = scmp.ne.s32.totalorder %s127, %s128
      %p137 = scmp.eq.s32.totalorder %s21, 0
      %p138 = por %p136, %p137
      %p139 = scmp.ne.s32.totalorder %s127, %s128
      %p140 = scmp.eq.s32.totalorder %s22, 3
      %p141 = por %p139, %p140
      %p143 = scmp.ne.s32.totalorder %s128, %s142
      %p144 = scmp.eq.s32.totalorder %s22, 0
      %p145 = por %p143, %p144
      %s147 = sadd.s32 %s146, 1
      %p150 = scmp.eq.s32.totalorder %s16, 3
      %p151 = scmp.ne.s32.totalorder %s146, %s148
      %p152 = scmp.eq.s32.totalorder %s16, 0
      %p153 = por %p151, %p152
      %p154 = scmp.ne.s32.totalorder %s146, %s148
      %p155 = scmp.eq.s32.totalorder %s21, 3
      %p156 = por %p154, %p155
      %p157 = scmp.ne.s32.totalorder %s148, %s149
      %p158 = scmp.eq.s32.totalorder %s21, 0
      %p159 = por %p157, %p158
      %p160 = scmp.ne.s32.totalorder %s148, %s149
      %p161 = scmp.eq.s32.totalorder %s22, 3
      %p162 = por %p160, %p161
      %p164 = scmp.ne.s32.totalorder %s149, %s163
      %p165 = scmp.eq.s32.totalorder %s22, 0
      %p166 = por %p164, %p165
      %s168 = sadd.s32 %s167, 1
      %p171 = scmp.eq.s32.totalorder %s16, 3
      %p172 = scmp.ne.s32.totalorder %s167, %s169
      %p173 = scmp.eq.s32.totalorder %s16, 0
      %p174 = por %p172, %p173
      %p175 = scmp.ne.s32.totalorder %s167, %s169
      %p176 = scmp.eq.s32.totalorder %s21, 3
      %p177 = por %p175, %p176
      %p178 = scmp.ne.s32.totalorder %s169, %s170
      %p179 = scmp.eq.s32.totalorder %s21, 0
      %p180 = por %p178, %p179
      %p181 = scmp.ne.s32.totalorder %s169, %s170
      %p182 = scmp.eq.s32.totalorder %s22, 3
      %p183 = por %p181, %p182
      %p185 = scmp.ne.s32.totalorder %s170, %s184
      %p186 = scmp.eq.s32.totalorder %s22, 0
      %p187 = por %p185, %p186
      %s188 = ssub.s32 %s23, %s35
      %s189 = ssub.s32 %s24, %s31
      %s190 = sor.u32 %s188, %s189
      %p191 = scmp.eq.s32.totalorder %s190, 0
      %s193 = sadd.s32 %s192, 1
      %s194 = scalar_select %p191, %s192, %s193
      %p197 = pneg %p191
      %p198 = scmp.eq.s32.totalorder %s16, 3
      %p199 = por %p197, %p198
      %p200 = scmp.ne.s32.totalorder %s192, %s195
      %p201 = scmp.eq.s32.totalorder %s16, 0
      %p202 = por %p200, %p201
      %p203 = scmp.ne.s32.totalorder %s192, %s195
      %p204 = scmp.eq.s32.totalorder %s21, 3
      %p205 = por %p203, %p204
      %p206 = scmp.ne.s32.totalorder %s195, %s196
      %p207 = scmp.eq.s32.totalorder %s21, 0
      %p208 = por %p206, %p207
      %p209 = scmp.ne.s32.totalorder %s195, %s196
      %p210 = scmp.eq.s32.totalorder %s22, 3
      %p211 = por %p209, %p210
      %p213 = scmp.ne.s32.totalorder %s196, %s212
      %p214 = scmp.eq.s32.totalorder %s22, 0
      %p215 = por %p213, %p214
      %s216 = ssub.s32 %s23, %s35
      %p217 = scmp.eq.s32.totalorder %s216, 0
      %s219 = sadd.s32 %s218, 1
      %s220 = scalar_select %p217, %s218, %s219
      %p223 = pneg %p217
      %p224 = scmp.eq.s32.totalorder %s16, 3
      %p225 = por %p223, %p224
      %p226 = scmp.ne.s32.totalorder %s218, %s221
      %p227 = scmp.eq.s32.totalorder %s16, 0
      %p228 = por %p226, %p227
      %p229 = scmp.ne.s32.totalorder %s218, %s221
      %p230 = scmp.eq.s32.totalorder %s21, 3
      %p231 = por %p229, %p230
      %p232 = scmp.ne.s32.totalorder %s221, %s222
      %p233 = scmp.eq.s32.totalorder %s21, 0
      %p234 = por %p232, %p233
      %p235 = scmp.ne.s32.totalorder %s221, %s222
      %p236 = scmp.eq.s32.totalorder %s22, 3
      %p237 = por %p235, %p236
      %p239 = scmp.ne.s32.totalorder %s222, %s238
      %p240 = scmp.eq.s32.totalorder %s22, 0
      %p241 = por %p239, %p240
      %s242 = ssub.s32 %s23, %s35
      %p243 = scmp.eq.s32.totalorder %s242, 0
      %s245 = sadd.s32 %s244, 1
      %s246 = scalar_select %p243, %s244, %s245
      %p249 = pneg %p243
      %p250 = scmp.eq.s32.totalorder %s16, 3
      %p251 = por %p249, %p250
      %p252 = scmp.ne.s32.totalorder %s244, %s247
      %p253 = scmp.eq.s32.totalorder %s16, 0
      %p254 = por %p252, %p253
      %p255 = scmp.ne.s32.totalorder %s244, %s247
      %p256 = scmp.eq.s32.totalorder %s21, 3
      %p257 = por %p255, %p256
      %p258 = scmp.ne.s32.totalorder %s247, %s248
      %p259 = scmp.eq.s32.totalorder %s21, 0
      %p260 = por %p258, %p259
      %p261 = scmp.ne.s32.totalorder %s247, %s248
      %p262 = scmp.eq.s32.totalorder %s22, 3
      %p263 = por %p261, %p262
      %p265 = scmp.ne.s32.totalorder %s248, %s264
      %p266 = scmp.eq.s32.totalorder %s22, 0
      %p267 = por %p265, %p266
      %p268 = scmp.le.s32.totalorder 1, %s16
      %p269 = scmp.lt.s32.totalorder %s16, 5
      %p270 = pnand %p268, %p269
      %p271 = pneg %p270
      // Predicated region
      $region9: #{rs_gcn_pallas.2} parent=5 // pred_check
        _
      $region10: #{rs_gcn_pallas.2} parent=5 // pred_check_branch
        %273 = sbr.rel (%p270) target = $region12
      $region11: #{rs_gcn_pallas.2} parent=5 // pred_region
        %s274 = ssub.s32 %s16, 1
        // Predicated region
        $region13: #{rs_gcn_pallas.2} parent=11 // pred_check
          %p275 = pneg %p75
        $region14: #{rs_gcn_pallas.2} parent=11 // pred_check_branch
          %277 = sbr.rel (%p275) target = $region16
        $region15: #{rs_gcn_pallas.2} parent=11 // pred_region
          _
        $region16: #{rs_gcn_pallas.2} parent=11 // pred_fallthru
          _
        // Predicated region
        $region17: #{rs_gcn_pallas.2} parent=11 // pred_check
          %p278 = pneg %p96
        $region18: #{rs_gcn_pallas.2} parent=11 // pred_check_branch
          %280 = sbr.rel (%p278) target = $region20
        $region19: #{rs_gcn_pallas.2} parent=11 // pred_region
          _
        $region20: #{rs_gcn_pallas.2} parent=11 // pred_fallthru
          _
        // Predicated region
        $region21: #{rs_gcn_pallas.2} parent=11 // pred_check
          %p281 = pneg %p117
        $region22: #{rs_gcn_pallas.2} parent=11 // pred_check_branch
          %283 = sbr.rel (%p281) target = $region24
        $region23: #{rs_gcn_pallas.2} parent=11 // pred_region
          _
        $region24: #{rs_gcn_pallas.2} parent=11 // pred_fallthru
          _
        // Predicated region
        $region25: #{rs_gcn_pallas.2} parent=11 // pred_check
          %p284 = pneg %p138
        $region26: #{rs_gcn_pallas.2} parent=11 // pred_check_branch
          %286 = sbr.rel (%p284) target = $region28
        $region27: #{rs_gcn_pallas.2} parent=11 // pred_region
          _
        $region28: #{rs_gcn_pallas.2} parent=11 // pred_fallthru
          _
        // Predicated region
        $region29: #{rs_gcn_pallas.2} parent=11 // pred_check
          %p287 = pneg %p159
        $region30: #{rs_gcn_pallas.2} parent=11 // pred_check_branch
          %289 = sbr.rel (%p287) target = $region32
        $region31: #{rs_gcn_pallas.2} parent=11 // pred_region
          _
        $region32: #{rs_gcn_pallas.2} parent=11 // pred_fallthru
          _
        // Predicated region
        $region33: #{rs_gcn_pallas.2} parent=11 // pred_check
          %p290 = pneg %p180
        $region34: #{rs_gcn_pallas.2} parent=11 // pred_check_branch
          %292 = sbr.rel (%p290) target = $region36
        $region35: #{rs_gcn_pallas.2} parent=11 // pred_region
          _
        $region36: #{rs_gcn_pallas.2} parent=11 // pred_fallthru
          _
      $region12: #{rs_gcn_pallas.2} parent=5 // pred_fallthru
        _
      %p293 = scmp.lt.s32.totalorder %s16, 4
      // Predicated region
      $region37: #{rs_gcn_pallas.2} parent=5 // pred_check
        %p294 = pneg %p293
      $region38: #{rs_gcn_pallas.2} parent=5 // pred_check_branch
        %296 = sbr.rel (%p294) target = $region40
      $region39: #{rs_gcn_pallas.2} parent=5 // pred_region
        // Predicated region
        $region41: #{rs_gcn_pallas.2} parent=39 // pred_check
          %p297 = pneg %p48
        $region42: #{rs_gcn_pallas.2} parent=39 // pred_check_branch
          %299 = sbr.rel (%p297) target = $region44
        $region43: #{rs_gcn_pallas.2} parent=39 // pred_region
          %p300 = scmp.lt.s32.totalorder %s23, 1
          %s301 = scalar_select %p300, %s23, 1
          %s302 = smul.addr %s301, 4
          %s303 = smul.addr %s302, 4
          %s304 = scalar_lea.vmem %s0, %s303
        $region44: #{rs_gcn_pallas.2} parent=39 // pred_fallthru
          _
      $region40: #{rs_gcn_pallas.2} parent=5 // pred_fallthru
        _
      %p305 = scmp.le.s32.totalorder 1, %s16
      %p306 = scmp.lt.s32.totalorder %s16, 5
      %p307 = pnand %p305, %p306
      %p308 = pneg %p307
      // Predicated region
      $region45: #{rs_gcn_pallas.2} parent=5 // pred_check
        _
      $region46: #{rs_gcn_pallas.2} parent=5 // pred_check_branch
        %310 = sbr.rel (%p307) target = $region48
      $region47: #{rs_gcn_pallas.2} parent=5 // pred_region
        %s311 = ssub.s32 %s16, 1
        %p312 = scmp.lt.s32.totalorder %s25, 1
        %s313 = scalar_select %p312, %s25, 1
        %s314 = smul.addr %s313, 4
        %s315 = smul.addr %s314, 4
        %s316 = scalar_lea.vmem %s0, %s315
        %p317 = pneg %p54
        %p318 = pneg %p51
        %p319 = pneg %p75
        %p320 = pneg %p72
        %p321 = pneg %p96
        %p322 = pneg %p93
        %p323 = pneg %p117
        %p324 = pneg %p114
        %p325 = pneg %p138
        %p326 = pneg %p135
        %p327 = pneg %p159
        %p328 = pneg %p156
        %p329 = pneg %p180
        %p330 = pneg %p177
        %p331 = pneg %p208
        %p332 = pneg %p205
        %s333 = sand.u32 %s195, 1
        %s334 = sand.u32 %s195, 1
        %s335 = smul.addr %s334, 8
        %s336 = scalar_lea.vmem [#allocation3], %s335
        %p337 = pneg %p234
        %p338 = pneg %p231
        %p339 = scmp.lt.s32.totalorder %s25, 1
        %s340 = scalar_select %p339, %s25, 1
        %s341 = smul.addr %s340, 2
        %s342 = smul.addr %s341, 8
        %s343 = scalar_lea.vmem %s8, %s342
        %p344 = pneg %p260
        %p345 = pneg %p257
        %p346 = scmp.lt.s32.totalorder %s25, 1
        %s347 = scalar_select %p346, %s25, 1
        %s348 = smul.addr %s347, 2
        %s349 = smul.addr %s348, 8
        %s350 = scalar_lea.vmem %s9, %s349
        %p351 = scmp.lt.s32.totalorder %s25, 1
        %s352 = scalar_select %p351, %s25, 1
        %s353 = smul.addr %s352, 4
        %s354 = smul.addr %s353, 4
        %s355 = scalar_lea.vmem %s0, %s354
        %p356 = scmp.lt.s32.totalorder %s25, 1
        %s357 = scalar_select %p356, %s25, 1
        %s358 = smul.addr %s357, 2
        %s359 = smul.addr %s358, 8
        %s360 = scalar_lea.vmem %s8, %s359
        %p361 = scmp.lt.s32.totalorder %s25, 1
        %s362 = scalar_select %p361, %s25, 1
        %s363 = smul.addr %s362, 2
        %s364 = smul.addr %s363, 8
        %s365 = scalar_lea.vmem %s9, %s364
        %p367 = scmp.eq.s32.totalorder %s26, 0
        // Predicated region
        $region49: #{rs_gcn_pallas.2} parent=47 // pred_check
          %p368 = pneg %p367
        $region50: #{rs_gcn_pallas.2} parent=47 // pred_check_branch
          %370 = sbr.rel (%p368) target = $region52
        $region51: #{rs_gcn_pallas.2} parent=47 // pred_region
          %vm371 = vcmask 7168
          %372 = vst.msk [vmem:[%s360] sm:$0xff] %vm371, 0.0
          %373 = vst.msk [vmem:[%s360 + $0x8] sm:$0xff] %vm371, 0.0
          %374 = vst.msk [vmem:[%s365] sm:$0xff] %vm371, 0.0
          %375 = vst.msk [vmem:[%s365 + $0x8] sm:$0xff] %vm371, 0.0
          loop: start=0, step=1, limit=2
          $region53: #{rs_gcn_pallas.2} parent=51 // loop_pre_header
            _
          $region54: #{rs_gcn_pallas.2} parent=51 // loop_header
            %s377 = sphi 0, %s381
            %p378 = scmp.ge.s32.totalorder %s377, 2
            %v382 = vphi 0.0, %v534
            %v383 = vphi 0.0, %v535
          $region55: #{rs_gcn_pallas.2} parent=51 // loop_header_branch
            %380 = sbr.rel (%p378) target = $region59
          $region56: #{rs_gcn_pallas.2} parent=51 // loop_body
            %s384 = smul.u32 %s377, 128
            %s385 = sshra.s32 %s384, 7
            %s386 = sand.u32 %s384, 127
            %s387 = smul.addr %s385, 4
            %s388 = scalar_lea.vmem %s355, %s387
            %v389 = vld [vmem:[%s388] sm:$0xf]
            %v390 = vld [vmem:[%s388 + $0x8] sm:$0xf]
            %v391 = vld [vmem:[%s1] sm:$0xf]
            %v392 = vld [vmem:[%s1 + $0x4] sm:$0xf]
            %v393 = vld [vmem:[%s1 + $0x8] sm:$0xf]
            %v394 = vld [vmem:[%s1 + $0xc] sm:$0xf]
            %v395 = vld [vmem:[%s2] sm:$0xff]
            %v396 = vld [vmem:[%s2 + $0x8] sm:$0xff]
            %v397 = vld [vmem:[%s2 + $0x10] sm:$0xff]
            %v398 = vld [vmem:[%s2 + $0x18] sm:$0xff]
            %400 = vset.pattern.permute.xlu0 0
            %401 = vperm.xlu0 %400, %v395
            %v402 = vpop.permute.xlu0 %401
            %405 = vset.pattern.permute.xlu0 0
            %406 = vperm.xlu0 %405, %v396
            %v407 = vpop.permute.xlu0 %406
            %410 = vset.pattern.permute.xlu0 0
            %411 = vperm.xlu0 %410, %v397
            %v412 = vpop.permute.xlu0 %411
            %415 = vset.pattern.permute.xlu0 0
            %416 = vperm.xlu0 %415, %v398
            %v417 = vpop.permute.xlu0 %416
            %v423 = vunpack.c.l.b16 %v391
            %v424 = vunpack.c.l.b16 %v392
            %v425 = vunpack.c.l.b16 %v393
            %v426 = vunpack.c.l.b16 %v394
            %v427 = vpack.c.b16 %v424, %v423
            %v428 = vpack.c.b16 %v426, %v425
            %v431 = vunpack.c.l.b16 %v389
            %v432 = vunpack.c.l.b16 %v390
            %v433 = vpack.c.b16 %v432, %v431
            %vm435 = vcmask 130048
            %v437 = vsel %vm435, %v427, 0
            %v440 = vsel %vm435, %v428, 0
            %442 = vmatprep.subr.bf16.mxu0 0
            %443 = vmatpush1.bf16.msra.mxu0 %v433
            %444 = vmatprep.subr.bf16.mxu0 0
            %445 = vmatpush1.bf16.msra.mxu0 0
            %446 = vmatprep.subr.bf16.mxu0 0
            %447 = vmatpush1.bf16.msra.mxu0 0
            %448 = vmatprep.subr.bf16.mxu0 0
            %449 = vmatpush1.bf16.msra.mxu0 0
            %450 = vmatprep.subr.bf16.mxu0 0
            %451 = vmatpush1.bf16.msra.mxu0 0
            %452 = vmatprep.subr.bf16.mxu0 0
            %453 = vmatpush1.bf16.msra.mxu0 0
            %454 = vmatprep.subr.bf16.mxu0 0
            %455 = vmatpush1.bf16.msra.mxu0 0
            %456 = vmatprep.subr.bf16.mxu0 0
            %457 = vmatpush1.bf16.msra.mxu0 0
            %458 = vmatprep.subr.bf16.mxu0 0
            %459 = vmatpush1.bf16.msra.mxu0 0
            %460 = vmatprep.subr.bf16.mxu0 0
            %461 = vmatpush1.bf16.msra.mxu0 0
            %462 = vmatprep.subr.bf16.mxu0 0
            %463 = vmatpush1.bf16.msra.mxu0 0
            %464 = vmatprep.subr.bf16.mxu0 0
            %465 = vmatpush1.bf16.msra.mxu0 0
            %466 = vmatprep.subr.bf16.mxu0 0
            %467 = vmatpush1.bf16.msra.mxu0 0
            %468 = vmatprep.subr.bf16.mxu0 0
            %469 = vmatpush1.bf16.msra.mxu0 0
            %470 = vmatprep.subr.bf16.mxu0 0
            %471 = vmatpush1.bf16.msra.mxu0 0
            %472 = vmatprep.subr.bf16.mxu0 0
            %473 = vmatpush1.bf16.msra.mxu0 0
            %474 = vmatprep.mubr.bf16.mxu0 0
            %475 = vmatmul.mubr.bf16.gmra.mrb[0].mxu0 %v437
            %v476 = vpop.f32.mrb[0].mxu0
            %v477 = vadd.f32 %v402, %v476
            %v478 = vpop.f32.mrb[0].mxu0
            %v479 = vpop.f32.mrb[0].mxu0
            %v480 = vadd.f32 %v407, %v479
            %v481 = vpop.f32.mrb[0].mxu0
            %482 = vmatprep.mubr.bf16.mxu0 0
            %483 = vmatmul.mubr.bf16.gmra.mrb[0].mxu0 %v440
            %v484 = vpop.f32.mrb[0].mxu0
            %v485 = vadd.f32 %v412, %v484
            %v486 = vpop.f32.mrb[0].mxu0
            %v487 = vpop.f32.mrb[0].mxu0
            %v488 = vadd.f32 %v417, %v487
            %v489 = vpop.f32.mrb[0].mxu0
            %490 = vdwg.mxu0
            %v491 = vpack.c.bf16 %v480, %v477
            %v492 = vpack.c.bf16 %v488, %v485
            %493 = vmatprep.subr.bf16.mxu0 0
            %494 = vmatpush1.bf16.xpose.msra.mxu0 %v492
            %495 = vmatprep.subr.bf16.mxu0 0
            %496 = vmatpush1.bf16.xpose.msra.mxu0 0
            %497 = vmatprep.subr.bf16.mxu0 0
            %498 = vmatpush1.bf16.xpose.msra.mxu0 0
            %499 = vmatprep.subr.bf16.mxu0 0
            %500 = vmatpush1.bf16.xpose.msra.mxu0 0
            %501 = vmatprep.subr.bf16.mxu0 0
            %502 = vmatpush1.bf16.xpose.msra.mxu0 0
            %503 = vmatprep.subr.bf16.mxu0 0
            %504 = vmatpush1.bf16.xpose.msra.mxu0 0
            %505 = vmatprep.subr.bf16.mxu0 0
            %506 = vmatpush1.bf16.xpose.msra.mxu0 0
            %507 = vmatprep.subr.bf16.mxu0 0
            %508 = vmatpush1.bf16.xpose.msra.mxu0 0
            %509 = vmatprep.subr.bf16.mxu0 0
            %510 = vmatpush1.bf16.xpose.msra.mxu0 0
            %511 = vmatprep.subr.bf16.mxu0 0
            %512 = vmatpush1.bf16.xpose.msra.mxu0 0
            %513 = vmatprep.subr.bf16.mxu0 0
            %514 = vmatpush1.bf16.xpose.msra.mxu0 0
            %515 = vmatprep.subr.bf16.mxu0 0
            %516 = vmatpush1.bf16.xpose.msra.mxu0 0
            %517 = vmatprep.subr.bf16.mxu0 0
            %518 = vmatpush1.bf16.xpose.msra.mxu0 0
            %519 = vmatprep.subr.bf16.mxu0 0
            %520 = vmatpush1.bf16.xpose.msra.mxu0 0
            %521 = vmatprep.subr.bf16.mxu0 0
            %522 = vmatpush1.bf16.xpose.msra.mxu0 0
            %523 = vmatprep.subr.bf16.mxu0 0
            %524 = vmatpush1.bf16.xpose.msra.mxu0 0
            %525 = vmatprep.mubr.bf16.mxu0 0
            %526 = vmatmul.mubr.bf16.gmra.mrb[0].mxu0 %v491
            %v527 = vpop.f32.mrb[0].mxu0
            %v528 = vadd.f32 0.0, %v527
            %v529 = vpop.f32.mrb[0].mxu0
            %v530 = vpop.f32.mrb[0].mxu0
            %v531 = vadd.f32 0.0, %v530
            %v532 = vpop.f32.mrb[0].mxu0
            %533 = vdwg.mxu0
            %v534 = vadd.f32 %v382, %v528
            %v535 = vadd.f32 %v383, %v531
          $region57: #{rs_gcn_pallas.2} parent=51 // loop_footer
            %s381 = sadd.s32 1, %s377
          $region58: #{rs_gcn_pallas.2} parent=51 // loop_footer_branch
            %376 = sbr.rel target = $region54
          $region59: #{rs_gcn_pallas.2} parent=51 // loop_exit
            _
          %v536 = vpack.c.bf16 %v383, %v382
          %vm537 = vcmask 130048
          %538 = vst.msk [vmem:[#allocation2] sm:$0xff] %vm537, %v536
        $region52: #{rs_gcn_pallas.2} parent=47 // pred_fallthru
          _
        %s539 = smul.u32 %s26, 128
        %s540 = sshra.s32 %s539, 7
        %s541 = sand.u32 %s539, 127
        %s542 = smul.addr %s540, 4
        %s543 = scalar_lea.vmem %s355, %s542
        %v544 = vld [vmem:[%s543] sm:$0xf]
        %v545 = vld [vmem:[%s543 + $0x8] sm:$0xf]
        %v546 = vld [vmem:[%s3] sm:$0xf]
        %v547 = vld [vmem:[%s3 + $0x4] sm:$0xf]
        %v548 = vld [vmem:[%s4] sm:$0xff]
        %v549 = vld [vmem:[%s4 + $0x8] sm:$0xff]
        %551 = vset.pattern.permute.xlu0 0
        %552 = vperm.xlu0 %551, %v548
        %v553 = vpop.permute.xlu0 %552
        %556 = vset.pattern.permute.xlu0 0
        %557 = vperm.xlu0 %556, %v549
        %v558 = vpop.permute.xlu0 %557
        %v562 = vunpack.c.l.b16 %v546
        %v563 = vunpack.c.l.b16 %v547
        %v564 = vpack.c.b16 %v563, %v562
        %v567 = vunpack.c.l.b16 %v544
        %v568 = vunpack.c.l.b16 %v545
        %v569 = vpack.c.b16 %v568, %v567
        %vm571 = vcmask 130048
        %v573 = vsel %vm571, %v564, 0
        %575 = vmatprep.subr.bf16.mxu0 0
        %576 = vmatpush1.bf16.msra.mxu0 %v569
        %577 = vmatprep.subr.bf16.mxu0 0
        %578 = vmatpush1.bf16.msra.mxu0 0
        %579 = vmatprep.subr.bf16.mxu0 0
        %580 = vmatpush1.bf16.msra.mxu0 0
        %581 = vmatprep.subr.bf16.mxu0 0
        %582 = vmatpush1.bf16.msra.mxu0 0
        %583 = vmatprep.subr.bf16.mxu0 0
        %584 = vmatpush1.bf16.msra.mxu0 0
        %585 = vmatprep.subr.bf16.mxu0 0
        %586 = vmatpush1.bf16.msra.mxu0 0
        %587 = vmatprep.subr.bf16.mxu0 0
        %588 = vmatpush1.bf16.msra.mxu0 0
        %589 = vmatprep.subr.bf16.mxu0 0
        %590 = vmatpush1.bf16.msra.mxu0 0
        %591 = vmatprep.subr.bf16.mxu0 0
        %592 = vmatpush1.bf16.msra.mxu0 0
        %593 = vmatprep.subr.bf16.mxu0 0
        %594 = vmatpush1.bf16.msra.mxu0 0
        %595 = vmatprep.subr.bf16.mxu0 0
        %596 = vmatpush1.bf16.msra.mxu0 0
        %597 = vmatprep.subr.bf16.mxu0 0
        %598 = vmatpush1.bf16.msra.mxu0 0
        %599 = vmatprep.subr.bf16.mxu0 0
        %600 = vmatpush1.bf16.msra.mxu0 0
        %601 = vmatprep.subr.bf16.mxu0 0
        %602 = vmatpush1.bf16.msra.mxu0 0
        %603 = vmatprep.subr.bf16.mxu0 0
        %604 = vmatpush1.bf16.msra.mxu0 0
        %605 = vmatprep.subr.bf16.mxu0 0
        %606 = vmatpush1.bf16.msra.mxu0 0
        %607 = vmatprep.mubr.bf16.mxu0 0
        %608 = vmatmul.mubr.bf16.gmra.mrb[0].mxu0 %v573
        %v609 = vpop.f32.mrb[0].mxu0
        %v610 = vadd.f32 %v553, %v609
        %v611 = vpop.f32.mrb[0].mxu0
        %v612 = vpop.f32.mrb[0].mxu0
        %v613 = vadd.f32 %v558, %v612
        %v614 = vpop.f32.mrb[0].mxu0
        %615 = vdwg.mxu0
        %v616 = vpack.c.bf16 %v613, %v610
        %v617 = vld [vmem:[#allocation2] sm:$0xff]
        %v619 = vsel %vm571, %v617, 0
        %621 = vmatprep.subr.bf16.mxu0 0
        %622 = vmatpush1.bf16.msra.mxu0 %v616
        %623 = vmatprep.subr.bf16.mxu0 0
        %624 = vmatpush1.bf16.msra.mxu0 0
        %625 = vmatprep.subr.bf16.mxu0 0
        %626 = vmatpush1.bf16.msra.mxu0 0
        %627 = vmatprep.subr.bf16.mxu0 0
        %628 = vmatpush1.bf16.msra.mxu0 0
        %629 = vmatprep.subr.bf16.mxu0 0
        %630 = vmatpush1.bf16.msra.mxu0 0
        %631 = vmatprep.subr.bf16.mxu0 0
        %632 = vmatpush1.bf16.msra.mxu0 0
        %633 = vmatprep.subr.bf16.mxu0 0
        %634 = vmatpush1.bf16.msra.mxu0 0
        %635 = vmatprep.subr.bf16.mxu0 0
        %636 = vmatpush1.bf16.msra.mxu0 0
        %637 = vmatprep.subr.bf16.mxu0 0
        %638 = vmatpush1.bf16.msra.mxu0 0
        %639 = vmatprep.subr.bf16.mxu0 0
        %640 = vmatpush1.bf16.msra.mxu0 0
        %641 = vmatprep.subr.bf16.mxu0 0
        %642 = vmatpush1.bf16.msra.mxu0 0
        %643 = vmatprep.subr.bf16.mxu0 0
        %644 = vmatpush1.bf16.msra.mxu0 0
        %645 = vmatprep.subr.bf16.mxu0 0
        %646 = vmatpush1.bf16.msra.mxu0 0
        %647 = vmatprep.subr.bf16.mxu0 0
        %648 = vmatpush1.bf16.msra.mxu0 0
        %649 = vmatprep.subr.bf16.mxu0 0
        %650 = vmatpush1.bf16.msra.mxu0 0
        %651 = vmatprep.subr.bf16.mxu0 0
        %652 = vmatpush1.bf16.msra.mxu0 0
        %653 = vmatprep.mubr.bf16.mxu0 0
        %654 = vmatmul.mubr.bf16.gmra.mrb[0].mxu0 %v619
        %v655 = vpop.f32.mrb[0].mxu0
        %v656 = vadd.f32 0.0, %v655
        %v657 = vpop.f32.mrb[0].mxu0
        %v658 = vpop.f32.mrb[0].mxu0
        %v659 = vadd.f32 0.0, %v658
        %v660 = vpop.f32.mrb[0].mxu0
        %661 = vdwg.mxu0
        %v662 = vld [vmem:[%s5] sm:$0xf]
        %v663 = vld [vmem:[%s5 + $0x4] sm:$0xf]
        %v664 = vpack.c.bf16 %v659, %v656
        %v665 = vld [vmem:[%s6] sm:$0xff]
        %v666 = vld [vmem:[%s6 + $0x8] sm:$0xff]
        %668 = vset.pattern.permute.xlu0 0
        %669 = vperm.xlu0 %668, %v665
        %v670 = vpop.permute.xlu0 %669
        %673 = vset.pattern.permute.xlu0 0
        %674 = vperm.xlu0 %673, %v666
        %v675 = vpop.permute.xlu0 %674
        %v679 = vunpack.c.l.b16 %v662
        %v680 = vunpack.c.l.b16 %v663
        %v681 = vpack.c.b16 %v680, %v679
        %v683 = vsel %vm571, %v681, 0
        %685 = vmatprep.subr.bf16.mxu0 0
        %686 = vmatpush1.bf16.msra.mxu0 %v664
        %687 = vmatprep.subr.bf16.mxu0 0
        %688 = vmatpush1.bf16.msra.mxu0 0
        %689 = vmatprep.subr.bf16.mxu0 0
        %690 = vmatpush1.bf16.msra.mxu0 0
        %691 = vmatprep.subr.bf16.mxu0 0
        %692 = vmatpush1.bf16.msra.mxu0 0
        %693 = vmatprep.subr.bf16.mxu0 0
        %694 = vmatpush1.bf16.msra.mxu0 0
        %695 = vmatprep.subr.bf16.mxu0 0
        %696 = vmatpush1.bf16.msra.mxu0 0
        %697 = vmatprep.subr.bf16.mxu0 0
        %698 = vmatpush1.bf16.msra.mxu0 0
        %699 = vmatprep.subr.bf16.mxu0 0
        %700 = vmatpush1.bf16.msra.mxu0 0
        %701 = vmatprep.subr.bf16.mxu0 0
        %702 = vmatpush1.bf16.msra.mxu0 0
        %703 = vmatprep.subr.bf16.mxu0 0
        %704 = vmatpush1.bf16.msra.mxu0 0
        %705 = vmatprep.subr.bf16.mxu0 0
        %706 = vmatpush1.bf16.msra.mxu0 0
        %707 = vmatprep.subr.bf16.mxu0 0
        %708 = vmatpush1.bf16.msra.mxu0 0
        %709 = vmatprep.subr.bf16.mxu0 0
        %710 = vmatpush1.bf16.msra.mxu0 0
        %711 = vmatprep.subr.bf16.mxu0 0
        %712 = vmatpush1.bf16.msra.mxu0 0
        %713 = vmatprep.subr.bf16.mxu0 0
        %714 = vmatpush1.bf16.msra.mxu0 0
        %715 = vmatprep.subr.bf16.mxu0 0
        %716 = vmatpush1.bf16.msra.mxu0 0
        %717 = vmatprep.mubr.bf16.mxu0 0
        %718 = vmatmul.mubr.bf16.gmra.mrb[0].mxu0 %v683
        %v719 = vpop.f32.mrb[0].mxu0
        %v720 = vadd.f32 %v670, %v719
        %v721 = vpop.f32.mrb[0].mxu0
        %v722 = vpop.f32.mrb[0].mxu0
        %v723 = vadd.f32 %v675, %v722
        %v724 = vpop.f32.mrb[0].mxu0
        %725 = vdwg.mxu0
        %v726 = vpack.c.bf16 %v723, %v720
        %v728 = vunpack.c.l.b16 %v726
        %v729 = vunpack.c.h.b16 %v726
        %v730 = vpack.c.b16 %v728, %v728
        %v731 = vpack.c.b16 %v729, %v729
        %734 = vst [vmem:[%s336] sm:$0xf] %v730
        %735 = vst [vmem:[%s336 + $0x4] sm:$0xf] %v731
        %v736 = vld [vmem:[%s360] sm:$0xff]
        %v737 = vld [vmem:[%s360 + $0x8] sm:$0xff]
        %738 = vadd.xlane.f32.xlu0 %v720
        %v739 = vpop.xlane.xlu0 %738
        %740 = vadd.xlane.f32.xlu0 %v723
        %v741 = vpop.xlane.xlu0 %740
        %v742 = vadd.f32 %v736, %v739
        %v743 = vadd.f32 %v737, %v741
        %vm744 = vcmask 7168
        %745 = vst.msk [vmem:[%s360] sm:$0xff] %vm744, %v742
        %746 = vst.msk [vmem:[%s360 + $0x8] sm:$0xff] %vm744, %v743
        %v747 = vld [vmem:[%s365] sm:$0xff]
        %v748 = vld [vmem:[%s365 + $0x8] sm:$0xff]
        %v749 = vmul.f32 %v720, %v720
        %v750 = vmul.f32 %v723, %v723
        %751 = vadd.xlane.f32.xlu0 %v749
        %v752 = vpop.xlane.xlu0 %751
        %753 = vadd.xlane.f32.xlu0 %v750
        %v754 = vpop.xlane.xlu0 %753
        %v755 = vadd.f32 %v747, %v752
        %v756 = vadd.f32 %v748, %v754
        %757 = vst.msk [vmem:[%s365] sm:$0xff] %vm744, %v755
        %758 = vst.msk [vmem:[%s365 + $0x8] sm:$0xff] %vm744, %v756
        %s759 = sand.u32 %s195, 1
        %s760 = sand.u32 %s195, 1
        %s761 = smul.addr %s760, 8
        %s762 = scalar_lea.vmem [#allocation3], %s761
        %p763 = scmp.lt.s32.totalorder %s25, 1
        %s764 = scalar_select %p763, %s25, 1
        %s765 = smul.addr %s764, 2
        %s766 = smul.addr %s765, 8
        %s767 = scalar_lea.vmem %s8, %s766
        %p768 = scmp.lt.s32.totalorder %s25, 1
        %s769 = scalar_select %p768, %s25, 1
        %s770 = smul.addr %s769, 2
        %s771 = smul.addr %s770, 8
        %s772 = scalar_lea.vmem %s9, %s771
        // Predicated region
        $region60: #{rs_gcn_pallas.2} parent=47 // pred_check
          %p773 = pneg %p205
        $region61: #{rs_gcn_pallas.2} parent=47 // pred_check_branch
          %775 = sbr.rel (%p773) target = $region63
        $region62: #{rs_gcn_pallas.2} parent=47 // pred_region
          %s776 = smul.addr %s25, 4
          %s777 = sadd.s32 %s26, %s776
          %s778 = smul.addr %s777, 4
          %s779 = scalar_lea.vmem %s7, %s778
          // Predicated region
          $region64: #{rs_gcn_pallas.2} parent=62 // pred_check
            _
          $region65: #{rs_gcn_pallas.2} parent=62 // pred_check_branch
            %781 = sbr.rel (0) target = $region67
          $region66: #{rs_gcn_pallas.2} parent=62 // pred_region
            // Predicated region
            $region68: #{rs_gcn_pallas.2} parent=66 // pred_check
              _
            $region69: #{rs_gcn_pallas.2} parent=66 // pred_check_branch
              %783 = sbr.rel target = $region71
            $region70: #{rs_gcn_pallas.2} parent=66 // pred_region
              // Predicated region
              $region83: #{rs_gcn_pallas.2} parent=70 // pred_check
                _
              $region84: #{rs_gcn_pallas.2} parent=70 // pred_check_branch
                %800 = sbr.rel (0) target = $region86
              $region85: #{rs_gcn_pallas.2} parent=70 // pred_region
                loop: start=0, step=1, limit=1
                $region87: #{rs_gcn_pallas.2} parent=85 // loop_pre_header
                  _
                $region88: #{rs_gcn_pallas.2} parent=85 // loop_header
                  %s802 = sphi 0, %s806
                  %p803 = scmp.ge.s32.totalorder %s802, 1
                  %s807 = sphi %s762, %s762
                  %s808 = sphi %s779, %s779
                $region89: #{rs_gcn_pallas.2} parent=85 // loop_header_branch
                  %805 = sbr.rel (%p803) target = $region93
                $region90: #{rs_gcn_pallas.2} parent=85 // loop_body
                  _
                $region91: #{rs_gcn_pallas.2} parent=85 // loop_footer
                  %s806 = sadd.s32 1, %s802
                $region92: #{rs_gcn_pallas.2} parent=85 // loop_footer_branch
                  %801 = sbr.rel target = $region88
                $region93: #{rs_gcn_pallas.2} parent=85 // loop_exit
                  _
                loop: start=0, step=1, limit=1
                $region94: #{rs_gcn_pallas.2} parent=85 // loop_pre_header
                  _
                $region95: #{rs_gcn_pallas.2} parent=85 // loop_header
                  %s811 = sphi 0, %s815
                  %p812 = scmp.ge.s32.totalorder %s811, 1
                  %s816 = sphi %s762, %s762
                  %s817 = sphi %s779, %s779
                $region96: #{rs_gcn_pallas.2} parent=85 // loop_header_branch
                  %814 = sbr.rel (%p812) target = $region100
                $region97: #{rs_gcn_pallas.2} parent=85 // loop_body
                  %v818 = vld [vmem:[%s816] sm:$0xf]
                  %819 = vst [vmem:[%s817] sm:$0xf] %v818
                  %v820 = vld [vmem:[%s816 + $0x4] sm:$0xf]
                  %821 = vst [vmem:[%s817 + $0x8] sm:$0xf] %v820
                $region98: #{rs_gcn_pallas.2} parent=85 // loop_footer
                  %s815 = sadd.s32 1, %s811
                $region99: #{rs_gcn_pallas.2} parent=85 // loop_footer_branch
                  %810 = sbr.rel target = $region95
                $region100: #{rs_gcn_pallas.2} parent=85 // loop_exit
                  _
              $region86: #{rs_gcn_pallas.2} parent=70 // pred_fallthru
                _
            $region71: #{rs_gcn_pallas.2} parent=66 // pred_fallthru
              _
            // Predicated region
            $region72: #{rs_gcn_pallas.2} parent=66 // pred_check
              _
            $region73: #{rs_gcn_pallas.2} parent=66 // pred_check_branch
              %785 = sbr.rel (0) target = $region75
            $region74: #{rs_gcn_pallas.2} parent=66 // pred_region
              loop: start=0, step=1, limit=1
              $region76: #{rs_gcn_pallas.2} parent=74 // loop_pre_header
                _
              $region77: #{rs_gcn_pallas.2} parent=74 // loop_header
                %s788 = sphi 0, %s792
                %p789 = scmp.ge.s32.totalorder %s788, 1
                %s793 = sphi %s762, %s762
                %s794 = sphi %s779, %s779
              $region78: #{rs_gcn_pallas.2} parent=74 // loop_header_branch
                %791 = sbr.rel (%p789) target = $region82
              $region79: #{rs_gcn_pallas.2} parent=74 // loop_body
                %v795 = vld [vmem:[%s793] sm:$0xf]
                %796 = vst [vmem:[%s794] sm:$0xf] %v795
                %v797 = vld [vmem:[%s793 + $0x4] sm:$0xf]
                %798 = vst [vmem:[%s794 + $0x8] sm:$0xf] %v797
              $region80: #{rs_gcn_pallas.2} parent=74 // loop_footer
                %s792 = sadd.s32 1, %s788
              $region81: #{rs_gcn_pallas.2} parent=74 // loop_footer_branch
                %787 = sbr.rel target = $region77
              $region82: #{rs_gcn_pallas.2} parent=74 // loop_exit
                _
            $region75: #{rs_gcn_pallas.2} parent=66 // pred_fallthru
              _
          $region67: #{rs_gcn_pallas.2} parent=62 // pred_fallthru
            _
          %822 = vnop
        $region63: #{rs_gcn_pallas.2} parent=47 // pred_fallthru
          _
        // Predicated region
        $region101: #{rs_gcn_pallas.2} parent=47 // pred_check
          %p823 = pneg %p231
        $region102: #{rs_gcn_pallas.2} parent=47 // pred_check_branch
          %825 = sbr.rel (%p823) target = $region104
        $region103: #{rs_gcn_pallas.2} parent=47 // pred_region
          _
        $region104: #{rs_gcn_pallas.2} parent=47 // pred_fallthru
          _
        // Predicated region
        $region105: #{rs_gcn_pallas.2} parent=47 // pred_check
          %p826 = pneg %p257
        $region106: #{rs_gcn_pallas.2} parent=47 // pred_check_branch
          %828 = sbr.rel (%p826) target = $region108
        $region107: #{rs_gcn_pallas.2} parent=47 // pred_region
          _
        $region108: #{rs_gcn_pallas.2} parent=47 // pred_fallthru
          _
      $region48: #{rs_gcn_pallas.2} parent=5 // pred_fallthru
        _
      %p829 = scmp.le.s32.totalorder 2, %s16
      // Predicated region
      $region109: #{rs_gcn_pallas.2} parent=5 // pred_check
        %p830 = pneg %p829
      $region110: #{rs_gcn_pallas.2} parent=5 // pred_check_branch
        %832 = sbr.rel (%p830) target = $region112
      $region111: #{rs_gcn_pallas.2} parent=5 // pred_region
        %s833 = ssub.s32 %s16, 2
        // Predicated region
        $region113: #{rs_gcn_pallas.2} parent=111 // pred_check
          %p834 = pneg %p211
        $region114: #{rs_gcn_pallas.2} parent=111 // pred_check_branch
          %836 = sbr.rel (%p834) target = $region116
        $region115: #{rs_gcn_pallas.2} parent=111 // pred_region
          %s837 = sand.u32 %s196, 1
          %s838 = sand.u32 %s196, 1
          %s839 = smul.addr %s838, 8
          %s840 = scalar_lea.vmem [#allocation3], %s839
        $region116: #{rs_gcn_pallas.2} parent=111 // pred_fallthru
          _
        // Predicated region
        $region117: #{rs_gcn_pallas.2} parent=111 // pred_check
          %p841 = pneg %p237
        $region118: #{rs_gcn_pallas.2} parent=111 // pred_check_branch
          %843 = sbr.rel (%p841) target = $region120
        $region119: #{rs_gcn_pallas.2} parent=111 // pred_region
          %p844 = scmp.lt.s32.totalorder %s27, 1
          %s845 = scalar_select %p844, %s27, 1
          %s846 = smul.addr %s845, 2
          %s847 = smul.addr %s846, 8
          %s848 = scalar_lea.vmem %s8, %s847
        $region120: #{rs_gcn_pallas.2} parent=111 // pred_fallthru
          _
        // Predicated region
        $region121: #{rs_gcn_pallas.2} parent=111 // pred_check
          %p849 = pneg %p263
        $region122: #{rs_gcn_pallas.2} parent=111 // pred_check_branch
          %851 = sbr.rel (%p849) target = $region124
        $region123: #{rs_gcn_pallas.2} parent=111 // pred_region
          %p852 = scmp.lt.s32.totalorder %s27, 1
          %s853 = scalar_select %p852, %s27, 1
          %s854 = smul.addr %s853, 2
          %s855 = smul.addr %s854, 8
          %s856 = scalar_lea.vmem %s9, %s855
        $region124: #{rs_gcn_pallas.2} parent=111 // pred_fallthru
          _
      $region112: #{rs_gcn_pallas.2} parent=5 // pred_fallthru
        _
    $region6: #{rs_gcn_pallas.2} parent=1 // loop_footer
      %s20 = sadd.s32 1, %s16
    $region7: #{rs_gcn_pallas.2} parent=1 // loop_footer_branch
      %15 = sbr.rel target = $region3
    $region8: #{rs_gcn_pallas.2} parent=1 // loop_exit
      _

</llo_original>
